<compile_context>
chip_gen: v6e
topology: v6e:2x2x1
jax: 0.10.0
libtpu: 0.0.40
codegen_flags: <defaults>
</compile_context>

<pallas_src>
import functools

import numpy as np

import jax
import jax.numpy as jnp
from jax.experimental import pallas as pl
from jax.experimental.pallas import tpu as pltpu


def _round_up(v, m):
    return ((v + m - 1) // m) * m


def _silu_sq4(z):
    """4 * SiLU(z)^2 via a tanh-based sigmoid (EUP slot, no VALU divide)."""
    g = z * (1.0 + jnp.tanh(0.5 * z))       # = 2 * z * sigmoid(z) = 2 * SiLU(z)
    return g * g


def _agent_weights(x_c, g_ref):
    """Per-agent quadratic weights tt/tb/bb computed from the x tile.

    g_ref holds four (d, na) 0/1 gather matrices selecting the x columns that
    form q (q[b, 4i+r] = x[b, 6i+r]); xq[k][b, a] are the four q entries that
    the kron/diag structure pairs with agent a (u_{2a}, u_{2a+1}, v_{2a},
    v_{2a+1}).
    """
    xq = [jnp.dot(x_c, g_ref[k], preferred_element_type=jnp.float32)
          for k in range(4)]
    tt = xq[0] * xq[0] + xq[1] * xq[1]
    tb = xq[0] * xq[2] + xq[1] * xq[3]
    bb = xq[2] * xq[2] + xq[3] * xq[3]
    return tt, tb, bb


def _gnn_h_kernel_select(x_ref, a_ref, g_ref, s_ref, o_ref, *, compute_dtype):
    """General-na path: group reduction via small 0.25-weighted selection matmuls."""
    x = x_ref[...]                                                    # (TB, d) f32
    x_c = x.astype(compute_dtype)
    z = jnp.dot(x_c, a_ref[...], preferred_element_type=jnp.float32)  # (TB, hp)
    z2 = _silu_sq4(z)                                                 # 4*SiLU(z)^2
    z2_c = z2.astype(compute_dtype)
    # red[g][b, a] = sum_{p in group g} SiLU(z[b, p*na + a])^2  (0.25 baked in S)
    red = [jnp.dot(z2_c, s_ref[k], preferred_element_type=jnp.float32)
           for k in range(4)]                                         # 4 x (TB, na)
    tt, tb, bb = _agent_weights(x_c, g_ref)
    contrib = red[0] * tt + red[1] * tb + red[2] * bb + red[3]
    # Lane-dense output row; the sublane->lane move rides the idle XLU slot.
    o_ref[...] = jnp.sum(contrib, axis=-1)[None, :]


def _gnn_h_kernel_slices(x_ref, a_ref, g_ref, o_ref, *, na, compute_dtype):
    """na % 128 == 0 path: lane-aligned slice+add group reduction (no S matmul)."""
    x = x_ref[...]
    x_c = x.astype(compute_dtype)
    z = jnp.dot(x_c, a_ref[...], preferred_element_type=jnp.float32)  # (TB, 25*na)
    z2 = _silu_sq4(z)

    def group_sum(p0, p1):
        acc = z2[:, p0 * na:(p0 + 1) * na]
        for p in range(p0 + 1, p1):
            acc = acc + z2[:, p * na:(p + 1) * na]
        return acc

    red_tt = group_sum(0, 5)
    red_tb = group_sum(5, 15)       # m12 + m21
    red_bb = group_sum(15, 20)
    red_pp = group_sum(20, 25)
    tt, tb, bb = _agent_weights(x_c, g_ref)
    contrib = red_tt * tt + red_tb * tb + red_bb * bb + red_pp
    o_ref[...] = (0.25 * jnp.sum(contrib, axis=-1))[None, :]


def _build_gather_matrices(na, d, dtype):
    """G[k] (d, na): 0/1 selection of the 4 q entries paired with agent a."""
    a = np.arange(na)
    k_idx = np.stack([2 * a, 2 * a + 1, 2 * na + 2 * a, 2 * na + 2 * a + 1])  # (4, na)
    cols = 6 * (k_idx // 4) + (k_idx % 4)          # x column of q index k
    G = np.zeros((4, d, na), np.float32)
    G[np.arange(4)[:, None], cols, a[None, :]] = 1.0
    return jnp.asarray(G, dtype=dtype)


def _build_group_selects(na, hp, dtype):
    """S[g] (hp, na): routes z2 column p*na+a to group g, scaled by 1/4 so z2 can
    be kept as 4*SiLU^2 (saves one VALU mul per element of the hp-wide stream)."""
    gmap = [0] * 5 + [1] * 10 + [2] * 5 + [3] * 5   # m11 | m12+m21 | m22 | mpp
    S = np.zeros((4, hp, na), np.float32)
    a = np.arange(na)
    for p in range(25):
        S[gmap[p], p * na + a, a] = 0.25
    return jnp.asarray(S, dtype=dtype)


def gnn_h_forward(x, A, *, block_b=2048, precision="bfloat16", vmem_limit_bytes=None):
    """Pallas-TPU forward of GNN_H.  x: (B, 6*na) f32, A: (6*na, 25*na)."""
    B, d = x.shape
    dA, h = A.shape
    na = d // 6
    assert dA == d and d == 6 * na and h == 25 * na, "GNN_H requires d=6*na, h=25*na"
    assert block_b % 128 == 0, "block_b must be a multiple of 128 (lane-dense output)"

    compute_dtype = jnp.bfloat16 if precision in ("bf16", "bfloat16") else jnp.float32
    use_slices = (na % 128 == 0)                  # lane-aligned group slices
    hp = h if use_slices else _round_up(h, 128)   # lane-dense hidden dim (pad inert)

    A_c = A.astype(compute_dtype)
    if hp != h:
        A_c = jnp.pad(A_c, ((0, 0), (0, hp - h)))
    G = _build_gather_matrices(na, d, compute_dtype)

    # Batch tile: as big as VMEM comfortably allows (fewer grid steps, longer MXU
    # runs), capped so the f32 intermediates stay well inside the v7x scoped
    # default (32 MiB); force >= 2 tiles for large B so both v7x TCs get work.
    vmem_cap = max(128, ((16 << 20) // (16 * hp)) // 128 * 128)
    tb_target = min(block_b, vmem_cap)
    if B <= tb_target:
        TB = _round_up((B + 1) // 2, 128) if B > 1024 else B
    else:
        TB = tb_target
    Bp = _round_up(B, TB)
    x_in = jnp.pad(x, ((0, Bp - B), (0, 0))) if Bp != B else x
    grid = (Bp // TB,)

    # NOTE: for very large na (A no longer VMEM-resident) a second "arbitrary"
    # grid axis over hp with a VMEM accumulator would be needed; not implemented.

    if use_slices:
        kernel = functools.partial(_gnn_h_kernel_slices, na=na,
                                   compute_dtype=compute_dtype)
    else:
        kernel = functools.partial(_gnn_h_kernel_select,
                                   compute_dtype=compute_dtype)

    in_specs = [
        pl.BlockSpec((TB, d), lambda i: (i, 0)),          # x batch tile
        pl.BlockSpec((d, hp), lambda i: (0, 0)),          # A resident
        pl.BlockSpec((4, d, na), lambda i: (0, 0, 0)),    # gather matrices resident
    ]
    operands = [x_in, A_c, G]
    if not use_slices:
        S = _build_group_selects(na, hp, compute_dtype)
        in_specs.append(pl.BlockSpec((4, hp, na), lambda i: (0, 0, 0)))
        operands.append(S)

    itemsize = jnp.dtype(compute_dtype).itemsize
    cost = pl.CostEstimate(
        flops=int(Bp * (2 * d * hp + 2 * hp * 4 * na + 2 * d * 4 * na + 6 * hp + 8 * na)),
        transcendentals=int(Bp * hp),
        bytes_accessed=int(4 * Bp * d + 4 * Bp
                           + itemsize * (d * hp + 4 * d * na
                                         + (0 if use_slices else 4 * hp * na))),
    )

    out_row = pl.pallas_call(
        kernel,
        out_shape=jax.ShapeDtypeStruct((1, Bp), jnp.float32),
        grid=grid,
        in_specs=in_specs,
        out_specs=pl.BlockSpec((1, TB), lambda i: (0, i)),
        compiler_params=pltpu.CompilerParams(
            dimension_semantics=("parallel",),            # megacore-shardable batch
            vmem_limit_bytes=vmem_limit_bytes,
        ),
        cost_estimate=cost,
    )(*operands)
    return out_row[0, :B].reshape(B, 1)


def gnn_h_reference(x, A):
    """Literal (pure-JAX) transcription of the PyTorch forward, for checking."""
    B, d = x.shape
    na = d // 6
    hi = jax.lax.Precision.HIGHEST
    z = jnp.dot(x, A, precision=hi)
    M = jax.nn.silu(z).reshape(B, 25, na)
    m11 = jnp.sum(M[:, 0:5, :] ** 2, axis=1)
    m12 = jnp.sum(M[:, 5:10, :] ** 2, axis=1)
    m21 = jnp.sum(M[:, 10:15, :] ** 2, axis=1)
    m22 = jnp.sum(M[:, 15:20, :] ** 2, axis=1)
    mpp = jnp.sum(M[:, 20:25, :] ** 2, axis=1)
    # torch.kron(v, ones(1,2)) == repeat-interleave by 2 along the last dim
    M11 = jnp.repeat(m11, 2, axis=1)
    M12 = jnp.repeat(m12, 2, axis=1)
    M21 = jnp.repeat(m21, 2, axis=1)
    M22 = jnp.repeat(m22, 2, axis=1)
    diag = jax.vmap(jnp.diag)
    D11, D12, D21, D22 = diag(M11), diag(M12), diag(M21), diag(M22)
    Mfull = jnp.concatenate(
        [jnp.concatenate([D11, D21], axis=1), jnp.concatenate([D12, D22], axis=1)],
        axis=2)
    q = jnp.zeros((B, 4 * na), dtype=x.dtype)
    q = q.at[:, 0::4].set(x[:, 0::6])
    q = q.at[:, 1::4].set(x[:, 1::6])
    q = q.at[:, 2::4].set(x[:, 2::6])
    q = q.at[:, 3::4].set(x[:, 3::6])
    q = q.reshape(B, 1, 4 * na)
    quad = jnp.matmul(
        q, jnp.matmul(Mfull, jnp.transpose(q, (0, 2, 1)), precision=hi),
        precision=hi).sum(2)
    return quad + jnp.sum(mpp, axis=1, keepdims=True)


if __name__ == "__main__":
    # Small shapes consistent with the module: na agents -> d = 6*na, h = 25*na.
    # B chosen so the batch pads (300 -> 384) and the grid has 3 tiles.
    B, na = 300, 8
    d, h = 6 * na, 25 * na          # d = 48, h = 200 (padded to 256 in-kernel)

    key = jax.random.PRNGKey(0)
    kx, ka = jax.random.split(key)
    x = jax.random.normal(kx, (B, d), dtype=jnp.float32)
    A = 0.01 * jax.random.normal(ka, (d, h), dtype=jnp.float32)   # nn.Parameter init

    ref = jax.block_until_ready(gnn_h_reference(x, A))

    # 1) float32 MXU path: strict elementwise check of the kernel semantics.
    fwd32 = jax.jit(functools.partial(gnn_h_forward, precision="float32", block_b=128))
    out32 = jax.block_until_ready(fwd32(x, A))
    assert out32.shape == (B, 1) and out32.dtype == jnp.float32
    if not jnp.allclose(out32, ref, rtol=1e-4, atol=1e-5):
        err = jnp.max(jnp.abs(out32 - ref))
        raise AssertionError(f"f32 mismatch: max abs err = {err}")

    # 2) default bfloat16 MXU path: aggregate relative-error check (bf16 inputs).
    fwd16 = jax.jit(functools.partial(gnn_h_forward, block_b=128))
    out16 = jax.block_until_ready(fwd16(x, A))
    rel = jnp.linalg.norm(out16 - ref) / jnp.linalg.norm(ref)
    if not bool(rel < 3e-2):
        raise AssertionError(f"bf16 mismatch: relative L2 error = {rel}")

    print("KERNEL_OK")
</pallas_src>

<mosaic_0001>
module attributes {stable_mosaic.version = 11 : i64} {
  func.func @_gnn_h_kernel_select(%arg0: i32, %arg1: memref<128x48xf32, #tpu.memory_space<vmem>>, %arg2: memref<48x256xf32, #tpu.memory_space<vmem>>, %arg3: memref<4x48x8xf32, #tpu.memory_space<vmem>>, %arg4: memref<4x256x8xf32, #tpu.memory_space<vmem>>, %arg5: memref<1x128xf32, #tpu.memory_space<vmem>>) attributes {dimension_semantics = [#tpu.dimension_semantics<parallel>], iteration_bounds = array<i64: 3>, scalar_prefetch = 0 : i64, scratch_operands = 0 : i64, tpu.core_type = #tpu.core_type<tc>, window_params = [{transform_indices = @transform_0, window_bounds = array<i64: 128, 48>}, {pipeline_mode = #tpu.pipeline_mode<synchronous>, transform_indices = @transform_1, window_bounds = array<i64: 48, 256>}, {pipeline_mode = #tpu.pipeline_mode<synchronous>, transform_indices = @transform_2, window_bounds = array<i64: 4, 48, 8>}, {pipeline_mode = #tpu.pipeline_mode<synchronous>, transform_indices = @transform_3, window_bounds = array<i64: 4, 256, 8>}, {transform_indices = @transform_4, window_bounds = array<i64: 1, 128>}]} {
    %c0 = arith.constant 0 : index
    %c0_0 = arith.constant 0 : index
    %0 = vector.load %arg1[%c0, %c0_0] : memref<128x48xf32, #tpu.memory_space<vmem>>, vector<128x48xf32>
    %c0_1 = arith.constant 0 : index
    %c0_2 = arith.constant 0 : index
    %1 = vector.load %arg2[%c0_1, %c0_2] : memref<48x256xf32, #tpu.memory_space<vmem>>, vector<48x256xf32>
    %cst = arith.constant dense<0.000000e+00> : vector<128x256xf32>
    %2 = tpu.matmul %0, %1, %cst {dimension_numbers = #tpu.dot_dimension_numbers<[1], [0], [0], [1], [0, 0, 1, 1], [], []>} : vector<128x48xf32>, vector<48x256xf32>, vector<128x256xf32> -> vector<128x256xf32>
    %cst_3 = arith.constant 5.000000e-01 : f32
    %3 = vector.broadcast %cst_3 : f32 to vector<128x256xf32>
    %4 = arith.mulf %3, %2 : vector<128x256xf32>
    %5 = math.tanh %4 : vector<128x256xf32>
    %cst_4 = arith.constant 1.000000e+00 : f32
    %6 = vector.broadcast %cst_4 : f32 to vector<128x256xf32>
    %7 = arith.addf %6, %5 : vector<128x256xf32>
    %8 = arith.mulf %2, %7 : vector<128x256xf32>
    %9 = arith.mulf %8, %8 : vector<128x256xf32>
    %c0_5 = arith.constant 0 : index
    %c0_6 = arith.constant 0 : index
    %c0_7 = arith.constant 0 : index
    %10 = vector.load %arg4[%c0_5, %c0_6, %c0_7] : memref<4x256x8xf32, #tpu.memory_space<vmem>>, vector<1x256x8xf32>
    %11 = vector.shape_cast %10 : vector<1x256x8xf32> to vector<256x8xf32>
    %cst_8 = arith.constant dense<0.000000e+00> : vector<128x8xf32>
    %12 = tpu.matmul %9, %11, %cst_8 {dimension_numbers = #tpu.dot_dimension_numbers<[1], [0], [0], [1], [0, 0, 1, 1], [], []>} : vector<128x256xf32>, vector<256x8xf32>, vector<128x8xf32> -> vector<128x8xf32>
    %c1 = arith.constant 1 : index
    %c0_9 = arith.constant 0 : index
    %c0_10 = arith.constant 0 : index
    %13 = vector.load %arg4[%c1, %c0_9, %c0_10] : memref<4x256x8xf32, #tpu.memory_space<vmem>>, vector<1x256x8xf32>
    %14 = vector.shape_cast %13 : vector<1x256x8xf32> to vector<256x8xf32>
    %cst_11 = arith.constant dense<0.000000e+00> : vector<128x8xf32>
    %15 = tpu.matmul %9, %14, %cst_11 {dimension_numbers = #tpu.dot_dimension_numbers<[1], [0], [0], [1], [0, 0, 1, 1], [], []>} : vector<128x256xf32>, vector<256x8xf32>, vector<128x8xf32> -> vector<128x8xf32>
    %c2 = arith.constant 2 : index
    %c0_12 = arith.constant 0 : index
    %c0_13 = arith.constant 0 : index
    %16 = vector.load %arg4[%c2, %c0_12, %c0_13] : memref<4x256x8xf32, #tpu.memory_space<vmem>>, vector<1x256x8xf32>
    %17 = vector.shape_cast %16 : vector<1x256x8xf32> to vector<256x8xf32>
    %cst_14 = arith.constant dense<0.000000e+00> : vector<128x8xf32>
    %18 = tpu.matmul %9, %17, %cst_14 {dimension_numbers = #tpu.dot_dimension_numbers<[1], [0], [0], [1], [0, 0, 1, 1], [], []>} : vector<128x256xf32>, vector<256x8xf32>, vector<128x8xf32> -> vector<128x8xf32>
    %c3 = arith.constant 3 : index
    %c0_15 = arith.constant 0 : index
    %c0_16 = arith.constant 0 : index
    %19 = vector.load %arg4[%c3, %c0_15, %c0_16] : memref<4x256x8xf32, #tpu.memory_space<vmem>>, vector<1x256x8xf32>
    %20 = vector.shape_cast %19 : vector<1x256x8xf32> to vector<256x8xf32>
    %cst_17 = arith.constant dense<0.000000e+00> : vector<128x8xf32>
    %21 = tpu.matmul %9, %20, %cst_17 {dimension_numbers = #tpu.dot_dimension_numbers<[1], [0], [0], [1], [0, 0, 1, 1], [], []>} : vector<128x256xf32>, vector<256x8xf32>, vector<128x8xf32> -> vector<128x8xf32>
    %c0_18 = arith.constant 0 : index
    %c0_19 = arith.constant 0 : index
    %c0_20 = arith.constant 0 : index
    %22 = vector.load %arg3[%c0_18, %c0_19, %c0_20] : memref<4x48x8xf32, #tpu.memory_space<vmem>>, vector<1x48x8xf32>
    %23 = vector.shape_cast %22 : vector<1x48x8xf32> to vector<48x8xf32>
    %cst_21 = arith.constant dense<0.000000e+00> : vector<128x8xf32>
    %24 = tpu.matmul %0, %23, %cst_21 {dimension_numbers = #tpu.dot_dimension_numbers<[1], [0], [0], [1], [0, 0, 1, 1], [], []>} : vector<128x48xf32>, vector<48x8xf32>, vector<128x8xf32> -> vector<128x8xf32>
    %c1_22 = arith.constant 1 : index
    %c0_23 = arith.constant 0 : index
    %c0_24 = arith.constant 0 : index
    %25 = vector.load %arg3[%c1_22, %c0_23, %c0_24] : memref<4x48x8xf32, #tpu.memory_space<vmem>>, vector<1x48x8xf32>
    %26 = vector.shape_cast %25 : vector<1x48x8xf32> to vector<48x8xf32>
    %cst_25 = arith.constant dense<0.000000e+00> : vector<128x8xf32>
    %27 = tpu.matmul %0, %26, %cst_25 {dimension_numbers = #tpu.dot_dimension_numbers<[1], [0], [0], [1], [0, 0, 1, 1], [], []>} : vector<128x48xf32>, vector<48x8xf32>, vector<128x8xf32> -> vector<128x8xf32>
    %c2_26 = arith.constant 2 : index
    %c0_27 = arith.constant 0 : index
    %c0_28 = arith.constant 0 : index
    %28 = vector.load %arg3[%c2_26, %c0_27, %c0_28] : memref<4x48x8xf32, #tpu.memory_space<vmem>>, vector<1x48x8xf32>
    %29 = vector.shape_cast %28 : vector<1x48x8xf32> to vector<48x8xf32>
    %cst_29 = arith.constant dense<0.000000e+00> : vector<128x8xf32>
    %30 = tpu.matmul %0, %29, %cst_29 {dimension_numbers = #tpu.dot_dimension_numbers<[1], [0], [0], [1], [0, 0, 1, 1], [], []>} : vector<128x48xf32>, vector<48x8xf32>, vector<128x8xf32> -> vector<128x8xf32>
    %c3_30 = arith.constant 3 : index
    %c0_31 = arith.constant 0 : index
    %c0_32 = arith.constant 0 : index
    %31 = vector.load %arg3[%c3_30, %c0_31, %c0_32] : memref<4x48x8xf32, #tpu.memory_space<vmem>>, vector<1x48x8xf32>
    %32 = vector.shape_cast %31 : vector<1x48x8xf32> to vector<48x8xf32>
    %cst_33 = arith.constant dense<0.000000e+00> : vector<128x8xf32>
    %33 = tpu.matmul %0, %32, %cst_33 {dimension_numbers = #tpu.dot_dimension_numbers<[1], [0], [0], [1], [0, 0, 1, 1], [], []>} : vector<128x48xf32>, vector<48x8xf32>, vector<128x8xf32> -> vector<128x8xf32>
    %34 = arith.mulf %24, %24 : vector<128x8xf32>
    %35 = arith.mulf %27, %27 : vector<128x8xf32>
    %36 = arith.addf %34, %35 : vector<128x8xf32>
    %37 = arith.mulf %24, %30 : vector<128x8xf32>
    %38 = arith.mulf %27, %33 : vector<128x8xf32>
    %39 = arith.addf %37, %38 : vector<128x8xf32>
    %40 = arith.mulf %30, %30 : vector<128x8xf32>
    %41 = arith.mulf %33, %33 : vector<128x8xf32>
    %42 = arith.addf %40, %41 : vector<128x8xf32>
    %43 = arith.mulf %12, %36 : vector<128x8xf32>
    %44 = arith.mulf %15, %39 : vector<128x8xf32>
    %45 = arith.addf %43, %44 : vector<128x8xf32>
    %46 = arith.mulf %18, %42 : vector<128x8xf32>
    %47 = arith.addf %45, %46 : vector<128x8xf32>
    %48 = arith.addf %47, %21 : vector<128x8xf32>
    %cst_34 = arith.constant dense<0.000000e+00> : vector<128xf32>
    %49 = vector.multi_reduction <add>, %48, %cst_34 [1] : vector<128x8xf32> to vector<128xf32>
    %50 = vector.shape_cast %49 : vector<128xf32> to vector<1x128xf32>
    %c0_35 = arith.constant 0 : index
    %c0_36 = arith.constant 0 : index
    %51 = vector.load %arg5[%c0_35, %c0_36] : memref<1x128xf32, #tpu.memory_space<vmem>>, vector<1x128xf32>
    tpu.vector_store %arg5[%c0_35, %c0_36], %50 {strides = array<i32>} : memref<1x128xf32, #tpu.memory_space<vmem>>, vector<1x128xf32>,
    return
  }
  func.func @transform_0(%arg0: i32) -> (i32, i32) {
    %c0_i32 = arith.constant 0 : i32
    %c0_i32_0 = arith.constant 0 : i32
    return %arg0, %c0_i32 : i32, i32
  }
  func.func @transform_1(%arg0: i32) -> (i32, i32) {
    %c0_i32 = arith.constant 0 : i32
    %c0_i32_0 = arith.constant 0 : i32
    %c0_i32_1 = arith.constant 0 : i32
    return %c0_i32, %c0_i32_0 : i32, i32
  }
  func.func @transform_2(%arg0: i32) -> (i32, i32, i32) {
    %c0_i32 = arith.constant 0 : i32
    %c0_i32_0 = arith.constant 0 : i32
    %c0_i32_1 = arith.constant 0 : i32
    %c0_i32_2 = arith.constant 0 : i32
    return %c0_i32, %c0_i32_0, %c0_i32_1 : i32, i32, i32
  }
  func.func @transform_3(%arg0: i32) -> (i32, i32, i32) {
    %c0_i32 = arith.constant 0 : i32
    %c0_i32_0 = arith.constant 0 : i32
    %c0_i32_1 = arith.constant 0 : i32
    %c0_i32_2 = arith.constant 0 : i32
    return %c0_i32, %c0_i32_0, %c0_i32_1 : i32, i32, i32
  }
  func.func @transform_4(%arg0: i32) -> (i32, i32) {
    %c0_i32 = arith.constant 0 : i32
    %c0_i32_0 = arith.constant 0 : i32
    return %c0_i32, %arg0 : i32, i32
  }
}

</mosaic_0001>

<llo_original>
// kernel: gnn_h_forward.1
$region0: #{gnn_h_forward.1}
  #allocation0 [shape = 'u32[]', space=smem, size = 0x4, offset = 0x4, fixed_abs, tag = 'smem constant byte address 0x4 - core index']
  #allocation1 [shape = 'u32[144,128]{1,0:T(1,128)}', space=vmem, size = 0x12000, scoped, tag = 'internal scratch']
  %s0 = inlined_call_operand.vmem [shape: f32[384,48], index: 0, kind: input, shape index: {}]
  %s1 = inlined_call_operand.vmem [shape: f32[48,256], index: 1, kind: input, shape index: {}]
  %s2 = inlined_call_operand.vmem [shape: f32[4,48,8], index: 2, kind: input, shape index: {}]
  %s3 = inlined_call_operand.vmem [shape: f32[4,256,8], index: 3, kind: input, shape index: {}]
  %s4 = inlined_call_operand.vmem [shape: f32[1,384], index: 4, kind: output, shape index: {}]
  %s5 = sld [smem:[#allocation0]]
  $region49: #{gnn_h_forward.1} parent=0
    _
  %s7 = ssub.s32 1, %s5
  %s8 = scalar_select 0, %s7, %s5
  loop: start=0, step=1, limit=5
  $region2: #{gnn_h_forward.1} parent=0 // loop_pre_header
    _
  $region3: #{gnn_h_forward.1} parent=0 // loop_header
    %s10 = sphi 0, %s14
    %p11 = scmp.ge.s32.totalorder %s10, 5
    %s20 = sphi 0, %s22
    %s23 = sphi 0, %s20
    %s24 = sphi 0, %s23
    %s40 = sphi 0, %s24
    %s44 = sphi 0, %s44
    %s46 = sphi 0, %s44
    %s47 = sphi 0, %s46
    %s61 = sphi 0, %s47
    %s65 = sphi 0, %s65
    %s67 = sphi 0, %s65
    %s68 = sphi 0, %s67
    %s82 = sphi 0, %s68
    %s86 = sphi 0, %s86
    %s88 = sphi 0, %s86
    %s89 = sphi 0, %s88
    %s103 = sphi 0, %s89
    %s109 = sphi 0, %s111
    %s112 = sphi 0, %s109
    %s113 = sphi 0, %s112
    %s129 = sphi 0, %s113
  $region4: #{gnn_h_forward.1} parent=0 // loop_header_branch
    %13 = sbr.rel (%p11) target = $region8
  $region5: #{gnn_h_forward.1} parent=0 // loop_body
    %s15 = ssub.s32 %s10, 1
    %s16 = ssub.s32 %s10, 2
    %s17 = sadd.s32 %s10, 1
    %s18 = ssub.s32 %s10, %s17
    %p19 = scmp.eq.s32.totalorder %s18, 0
    %s21 = sadd.s32 %s20, 1
    %s22 = scalar_select %p19, %s20, %s21
    %p25 = pneg %p19
    %p26 = scmp.eq.s32.totalorder %s10, 2
    %p27 = por %p25, %p26
    %p28 = scmp.ne.s32.totalorder %s20, %s23
    %p29 = scmp.eq.s32.totalorder %s10, 0
    %p30 = por %p28, %p29
    %p31 = scmp.ne.s32.totalorder %s20, %s23
    %p32 = scmp.eq.s32.totalorder %s15, 2
    %p33 = por %p31, %p32
    %p34 = scmp.ne.s32.totalorder %s23, %s24
    %p35 = scmp.eq.s32.totalorder %s15, 0
    %p36 = por %p34, %p35
    %p37 = scmp.ne.s32.totalorder %s23, %s24
    %p38 = scmp.eq.s32.totalorder %s16, 2
    %p39 = por %p37, %p38
    %p41 = scmp.ne.s32.totalorder %s24, %s40
    %p42 = scmp.eq.s32.totalorder %s16, 0
    %p43 = por %p41, %p42
    %s45 = sadd.s32 %s44, 1
    %p48 = scmp.eq.s32.totalorder %s10, 2
    %p49 = scmp.ne.s32.totalorder %s44, %s46
    %p50 = scmp.eq.s32.totalorder %s10, 0
    %p51 = por %p49, %p50
    %p52 = scmp.ne.s32.totalorder %s44, %s46
    %p53 = scmp.eq.s32.totalorder %s15, 2
    %p54 = por %p52, %p53
    %p55 = scmp.ne.s32.totalorder %s46, %s47
    %p56 = scmp.eq.s32.totalorder %s15, 0
    %p57 = por %p55, %p56
    %p58 = scmp.ne.s32.totalorder %s46, %s47
    %p59 = scmp.eq.s32.totalorder %s16, 2
    %p60 = por %p58, %p59
    %p62 = scmp.ne.s32.totalorder %s47, %s61
    %p63 = scmp.eq.s32.totalorder %s16, 0
    %p64 = por %p62, %p63
    %s66 = sadd.s32 %s65, 1
    %p69 = scmp.eq.s32.totalorder %s10, 2
    %p70 = scmp.ne.s32.totalorder %s65, %s67
    %p71 = scmp.eq.s32.totalorder %s10, 0
    %p72 = por %p70, %p71
    %p73 = scmp.ne.s32.totalorder %s65, %s67
    %p74 = scmp.eq.s32.totalorder %s15, 2
    %p75 = por %p73, %p74
    %p76 = scmp.ne.s32.totalorder %s67, %s68
    %p77 = scmp.eq.s32.totalorder %s15, 0
    %p78 = por %p76, %p77
    %p79 = scmp.ne.s32.totalorder %s67, %s68
    %p80 = scmp.eq.s32.totalorder %s16, 2
    %p81 = por %p79, %p80
    %p83 = scmp.ne.s32.totalorder %s68, %s82
    %p84 = scmp.eq.s32.totalorder %s16, 0
    %p85 = por %p83, %p84
    %s87 = sadd.s32 %s86, 1
    %p90 = scmp.eq.s32.totalorder %s10, 2
    %p91 = scmp.ne.s32.totalorder %s86, %s88
    %p92 = scmp.eq.s32.totalorder %s10, 0
    %p93 = por %p91, %p92
    %p94 = scmp.ne.s32.totalorder %s86, %s88
    %p95 = scmp.eq.s32.totalorder %s15, 2
    %p96 = por %p94, %p95
    %p97 = scmp.ne.s32.totalorder %s88, %s89
    %p98 = scmp.eq.s32.totalorder %s15, 0
    %p99 = por %p97, %p98
    %p100 = scmp.ne.s32.totalorder %s88, %s89
    %p101 = scmp.eq.s32.totalorder %s16, 2
    %p102 = por %p100, %p101
    %p104 = scmp.ne.s32.totalorder %s89, %s103
    %p105 = scmp.eq.s32.totalorder %s16, 0
    %p106 = por %p104, %p105
    %s107 = ssub.s32 %s10, %s17
    %p108 = scmp.eq.s32.totalorder %s107, 0
    %s110 = sadd.s32 %s109, 1
    %s111 = scalar_select %p108, %s109, %s110
    %p114 = pneg %p108
    %p115 = scmp.eq.s32.totalorder %s10, 2
    %p116 = por %p114, %p115
    %p117 = scmp.ne.s32.totalorder %s109, %s112
    %p118 = scmp.eq.s32.totalorder %s10, 0
    %p119 = por %p117, %p118
    %p120 = scmp.ne.s32.totalorder %s109, %s112
    %p121 = scmp.eq.s32.totalorder %s15, 2
    %p122 = por %p120, %p121
    %p123 = scmp.ne.s32.totalorder %s112, %s113
    %p124 = scmp.eq.s32.totalorder %s15, 0
    %p125 = por %p123, %p124
    %p126 = scmp.ne.s32.totalorder %s112, %s113
    %p127 = scmp.eq.s32.totalorder %s16, 2
    %p128 = por %p126, %p127
    %p130 = scmp.ne.s32.totalorder %s113, %s129
    %p131 = scmp.eq.s32.totalorder %s16, 0
    %p132 = por %p130, %p131
    %p133 = scmp.le.s32.totalorder 1, %s10
    %p134 = scmp.lt.s32.totalorder %s10, 4
    %p135 = pnand %p133, %p134
    %p136 = pneg %p135
    // Predicated region
    $region9: #{gnn_h_forward.1} parent=5 // pred_check
      _
    $region10: #{gnn_h_forward.1} parent=5 // pred_check_branch
      %138 = sbr.rel (%p135) target = $region12
    $region11: #{gnn_h_forward.1} parent=5 // pred_region
      %s139 = ssub.s32 %s10, 1
      // Predicated region
      $region13: #{gnn_h_forward.1} parent=11 // pred_check
        %p140 = pneg %p57
      $region14: #{gnn_h_forward.1} parent=11 // pred_check_branch
        %142 = sbr.rel (%p140) target = $region16
      $region15: #{gnn_h_forward.1} parent=11 // pred_region
        _
      $region16: #{gnn_h_forward.1} parent=11 // pred_fallthru
        _
      // Predicated region
      $region17: #{gnn_h_forward.1} parent=11 // pred_check
        %p143 = pneg %p78
      $region18: #{gnn_h_forward.1} parent=11 // pred_check_branch
        %145 = sbr.rel (%p143) target = $region20
      $region19: #{gnn_h_forward.1} parent=11 // pred_region
        _
      $region20: #{gnn_h_forward.1} parent=11 // pred_fallthru
        _
      // Predicated region
      $region21: #{gnn_h_forward.1} parent=11 // pred_check
        %p146 = pneg %p99
      $region22: #{gnn_h_forward.1} parent=11 // pred_check_branch
        %148 = sbr.rel (%p146) target = $region24
      $region23: #{gnn_h_forward.1} parent=11 // pred_region
        _
      $region24: #{gnn_h_forward.1} parent=11 // pred_fallthru
        _
    $region12: #{gnn_h_forward.1} parent=5 // pred_fallthru
      _
    %p149 = scmp.lt.s32.totalorder %s10, 3
    // Predicated region
    $region25: #{gnn_h_forward.1} parent=5 // pred_check
      %p150 = pneg %p149
    $region26: #{gnn_h_forward.1} parent=5 // pred_check_branch
      %152 = sbr.rel (%p150) target = $region28
    $region27: #{gnn_h_forward.1} parent=5 // pred_region
      // Predicated region
      $region29: #{gnn_h_forward.1} parent=27 // pred_check
        %p153 = pneg %p30
      $region30: #{gnn_h_forward.1} parent=27 // pred_check_branch
        %155 = sbr.rel (%p153) target = $region32
      $region31: #{gnn_h_forward.1} parent=27 // pred_region
        %s156 = smul.u32 16, %s10
        %p157 = scmp.lt.s32.totalorder %s156, 47
        %s158 = scalar_select %p157, %s156, 47
        %s159 = smul.addr %s158, 8
        %s160 = scalar_lea.vmem %s0, %s159
        %s161 = smul.u32 16, %s10
      $region32: #{gnn_h_forward.1} parent=27 // pred_fallthru
        _
    $region28: #{gnn_h_forward.1} parent=5 // pred_fallthru
      _
    %p162 = scmp.le.s32.totalorder 1, %s10
    %p163 = scmp.lt.s32.totalorder %s10, 4
    %p164 = pnand %p162, %p163
    %p165 = pneg %p164
    // Predicated region
    $region33: #{gnn_h_forward.1} parent=5 // pred_check
      _
    $region34: #{gnn_h_forward.1} parent=5 // pred_check_branch
      %167 = sbr.rel (%p164) target = $region36
    $region35: #{gnn_h_forward.1} parent=5 // pred_region
      %s168 = ssub.s32 %s10, 1
      %s169 = smul.u32 16, %s15
      %p170 = scmp.lt.s32.totalorder %s169, 47
      %s171 = scalar_select %p170, %s169, 47
      %s172 = smul.addr %s171, 8
      %s173 = scalar_lea.vmem %s0, %s172
      %p174 = pneg %p36
      %p175 = pneg %p33
      %p176 = pneg %p57
      %p177 = pneg %p54
      %p178 = pneg %p78
      %p179 = pneg %p75
      %p180 = pneg %p99
      %p181 = pneg %p96
      %p182 = pneg %p125
      %p183 = pneg %p122
      %p184 = scmp.lt.s32.totalorder %s15, 2
      %s185 = scalar_select %p184, %s15, 2
      %s186 = scalar_lea.vmem %s4, %s185
      %s187 = smul.u32 16, %s15
      %p188 = scmp.lt.s32.totalorder %s187, 47
      %s189 = scalar_select %p188, %s187, 47
      %s190 = smul.addr %s189, 8
      %s191 = scalar_lea.vmem %s0, %s190
      %s192 = smul.u32 16, %s15
      %p193 = scmp.lt.s32.totalorder %s15, 2
      %s194 = scalar_select %p193, %s15, 2
      %s195 = scalar_lea.vmem %s4, %s194
      %v196 = vld [vmem:[%s191] sm:$0xff]
      %v197 = vld [vmem:[%s191 + $0x8] sm:$0xff]
      %v198 = vld [vmem:[%s191 + $0x10] sm:$0xff]
      %v199 = vld [vmem:[%s191 + $0x18] sm:$0xff]
      %v200 = vld [vmem:[%s191 + $0x20] sm:$0xff]
      %v201 = vld [vmem:[%s191 + $0x28] sm:$0xff]
      %v202 = vld [vmem:[%s191 + $0x30] sm:$0xff]
      %v203 = vld [vmem:[%s191 + $0x38] sm:$0xff]
      %v204 = vld [vmem:[%s191 + $0x40] sm:$0xff]
      %v205 = vld [vmem:[%s191 + $0x48] sm:$0xff]
      %v206 = vld [vmem:[%s191 + $0x50] sm:$0xff]
      %v207 = vld [vmem:[%s191 + $0x58] sm:$0xff]
      %v208 = vld [vmem:[%s191 + $0x60] sm:$0xff]
      %v209 = vld [vmem:[%s191 + $0x68] sm:$0xff]
      %v210 = vld [vmem:[%s191 + $0x70] sm:$0xff]
      %v211 = vld [vmem:[%s191 + $0x78] sm:$0xff]
      %v212 = vld [vmem:[%s1] sm:$0xff]
      %v213 = vld [vmem:[%s1 + $0x8] sm:$0xff]
      %v214 = vld [vmem:[%s1 + $0x10] sm:$0xff]
      %v215 = vld [vmem:[%s1 + $0x18] sm:$0xff]
      %v216 = vld [vmem:[%s1 + $0x20] sm:$0xff]
      %v217 = vld [vmem:[%s1 + $0x28] sm:$0xff]
      %v218 = vld [vmem:[%s1 + $0x30] sm:$0xff]
      %v219 = vld [vmem:[%s1 + $0x38] sm:$0xff]
      %v220 = vld [vmem:[%s1 + $0x40] sm:$0xff]
      %v221 = vld [vmem:[%s1 + $0x48] sm:$0xff]
      %v222 = vld [vmem:[%s1 + $0x50] sm:$0xff]
      %v223 = vld [vmem:[%s1 + $0x58] sm:$0xff]
      %vm224 = vcmask 392192
      %v226 = vsel %vm224, %v196, 0
      %v229 = vsel %vm224, %v197, 0
      %v232 = vsel %vm224, %v198, 0
      %v235 = vsel %vm224, %v199, 0
      %v238 = vsel %vm224, %v200, 0
      %v241 = vsel %vm224, %v201, 0
      %v244 = vsel %vm224, %v202, 0
      %v247 = vsel %vm224, %v203, 0
      %v250 = vsel %vm224, %v204, 0
      %v253 = vsel %vm224, %v205, 0
      %v256 = vsel %vm224, %v206, 0
      %v259 = vsel %vm224, %v207, 0
      %v262 = vsel %vm224, %v208, 0
      %v265 = vsel %vm224, %v209, 0
      %v268 = vsel %vm224, %v210, 0
      %v271 = vsel %vm224, %v211, 0
      %273 = vmatprep.subr.mxu0 0.0
      %274 = vmatpush1.msra.mxu0 0.0
      %275 = vmatprep.subr.mxu0 0.0
      %276 = vmatpush1.msra.mxu0 0.0
      %277 = vmatprep.subr.mxu0 0.0
      %278 = vmatpush1.msra.mxu0 0.0
      %279 = vmatprep.subr.mxu0 0.0
      %280 = vmatpush1.msra.mxu0 0.0
      %281 = vmatprep.subr.mxu0 0.0
      %282 = vmatpush1.msra.mxu0 0.0
      %283 = vmatprep.subr.mxu0 0.0
      %284 = vmatpush1.msra.mxu0 0.0
      %285 = vmatprep.subr.mxu0 0.0
      %286 = vmatpush1.msra.mxu0 0.0
      %287 = vmatprep.subr.mxu0 0.0
      %288 = vmatpush1.msra.mxu0 0.0
      %289 = vmatprep.subr.mxu0 0.0
      %290 = vmatpush1.msra.mxu0 0.0
      %291 = vmatprep.subr.mxu0 0.0
      %292 = vmatpush1.msra.mxu0 0.0
      %293 = vmatprep.subr.mxu0 %v223
      %294 = vmatpush1.msra.mxu0 %v222
      %295 = vmatprep.subr.mxu0 %v221
      %296 = vmatpush1.msra.mxu0 %v220
      %297 = vmatprep.subr.mxu0 %v219
      %298 = vmatpush1.msra.mxu0 %v218
      %299 = vmatprep.subr.mxu0 %v217
      %300 = vmatpush1.msra.mxu0 %v216
      %301 = vmatprep.subr.mxu0 %v215
      %302 = vmatpush1.msra.mxu0 %v214
      %303 = vmatprep.subr.mxu0 %v213
      %304 = vmatpush1.msra.mxu0 %v212
      %305 = vmatprep.subr.mxu0 0.0
      %306 = vmatpush2.msra.mxu0 0.0
      %307 = vmatprep.subr.mxu0 0.0
      %308 = vmatpush2.msra.mxu0 0.0
      %309 = vmatprep.subr.mxu0 0.0
      %310 = vmatpush2.msra.mxu0 0.0
      %311 = vmatprep.subr.mxu0 0.0
      %312 = vmatpush2.msra.mxu0 0.0
      %313 = vmatprep.subr.mxu0 0.0
      %314 = vmatpush2.msra.mxu0 0.0
      %315 = vmatprep.subr.mxu0 0.0
      %316 = vmatpush2.msra.mxu0 0.0
      %317 = vmatprep.subr.mxu0 0.0
      %318 = vmatpush2.msra.mxu0 0.0
      %319 = vmatprep.subr.mxu0 0.0
      %320 = vmatpush2.msra.mxu0 0.0
      %321 = vmatprep.subr.mxu0 0.0
      %322 = vmatpush2.msra.mxu0 0.0
      %323 = vmatprep.subr.mxu0 0.0
      %324 = vmatpush2.msra.mxu0 0.0
      %325 = vmatprep.subr.mxu0 0.0
      %326 = vmatpush2.msra.mxu0 0.0
      %327 = vmatprep.subr.mxu0 0.0
      %328 = vmatpush2.msra.mxu0 0.0
      %329 = vmatprep.subr.mxu0 0.0
      %330 = vmatpush2.msra.mxu0 0.0
      %331 = vmatprep.subr.mxu0 0.0
      %332 = vmatpush2.msra.mxu0 0.0
      %333 = vmatprep.subr.mxu0 0.0
      %334 = vmatpush2.msra.mxu0 0.0
      %335 = vmatprep.subr.mxu0 0.0
      %336 = vmatpush2.msra.mxu0 0.0
      %337 = vmatprep.mubr.f32.mxu0 0.0
      %338 = vmatmul.mubr.f32.gmra.mxu0 %v226
      %v339 = vpop.f32.mrf.mxu0
      %v340 = vadd.f32 0.0, %v339
      %v341 = vpop.f32.mrf.mxu0
      %v342 = vadd.f32 0.0, %v341
      %343 = vmatprep.mubr.f32.mxu0 0.0
      %344 = vmatmul.mubr.f32.gmra.mxu0 %v229
      %v345 = vpop.f32.mrf.mxu0
      %v346 = vadd.f32 0.0, %v345
      %v347 = vpop.f32.mrf.mxu0
      %v348 = vadd.f32 0.0, %v347
      %349 = vmatprep.mubr.f32.mxu0 0.0
      %350 = vmatmul.mubr.f32.gmra.mxu0 %v232
      %v351 = vpop.f32.mrf.mxu0
      %v352 = vadd.f32 0.0, %v351
      %v353 = vpop.f32.mrf.mxu0
      %v354 = vadd.f32 0.0, %v353
      %355 = vmatprep.mubr.f32.mxu0 0.0
      %356 = vmatmul.mubr.f32.gmra.mxu0 %v235
      %v357 = vpop.f32.mrf.mxu0
      %v358 = vadd.f32 0.0, %v357
      %v359 = vpop.f32.mrf.mxu0
      %v360 = vadd.f32 0.0, %v359
      %361 = vmatprep.mubr.f32.mxu0 0.0
      %362 = vmatmul.mubr.f32.gmra.mxu0 %v238
      %v363 = vpop.f32.mrf.mxu0
      %v364 = vadd.f32 0.0, %v363
      %v365 = vpop.f32.mrf.mxu0
      %v366 = vadd.f32 0.0, %v365
      %367 = vmatprep.mubr.f32.mxu0 0.0
      %368 = vmatmul.mubr.f32.gmra.mxu0 %v241
      %v369 = vpop.f32.mrf.mxu0
      %v370 = vadd.f32 0.0, %v369
      %v371 = vpop.f32.mrf.mxu0
      %v372 = vadd.f32 0.0, %v371
      %373 = vmatprep.mubr.f32.mxu0 0.0
      %374 = vmatmul.mubr.f32.gmra.mxu0 %v244
      %v375 = vpop.f32.mrf.mxu0
      %v376 = vadd.f32 0.0, %v375
      %v377 = vpop.f32.mrf.mxu0
      %v378 = vadd.f32 0.0, %v377
      %379 = vmatprep.mubr.f32.mxu0 0.0
      %380 = vmatmul.mubr.f32.gmra.mxu0 %v247
      %v381 = vpop.f32.mrf.mxu0
      %v382 = vadd.f32 0.0, %v381
      %v383 = vpop.f32.mrf.mxu0
      %v384 = vadd.f32 0.0, %v383
      %385 = vmatprep.mubr.f32.mxu0 0.0
      %386 = vmatmul.mubr.f32.gmra.mxu0 %v250
      %v387 = vpop.f32.mrf.mxu0
      %v388 = vadd.f32 0.0, %v387
      %v389 = vpop.f32.mrf.mxu0
      %v390 = vadd.f32 0.0, %v389
      %391 = vmatprep.mubr.f32.mxu0 0.0
      %392 = vmatmul.mubr.f32.gmra.mxu0 %v253
      %v393 = vpop.f32.mrf.mxu0
      %v394 = vadd.f32 0.0, %v393
      %v395 = vpop.f32.mrf.mxu0
      %v396 = vadd.f32 0.0, %v395
      %397 = vmatprep.mubr.f32.mxu0 0.0
      %398 = vmatmul.mubr.f32.gmra.mxu0 %v256
      %v399 = vpop.f32.mrf.mxu0
      %v400 = vadd.f32 0.0, %v399
      %v401 = vpop.f32.mrf.mxu0
      %v402 = vadd.f32 0.0, %v401
      %403 = vmatprep.mubr.f32.mxu0 0.0
      %404 = vmatmul.mubr.f32.gmra.mxu0 %v259
      %v405 = vpop.f32.mrf.mxu0
      %v406 = vadd.f32 0.0, %v405
      %v407 = vpop.f32.mrf.mxu0
      %v408 = vadd.f32 0.0, %v407
      %409 = vmatprep.mubr.f32.mxu0 0.0
      %410 = vmatmul.mubr.f32.gmra.mxu0 %v262
      %v411 = vpop.f32.mrf.mxu0
      %v412 = vadd.f32 0.0, %v411
      %v413 = vpop.f32.mrf.mxu0
      %v414 = vadd.f32 0.0, %v413
      %415 = vmatprep.mubr.f32.mxu0 0.0
      %416 = vmatmul.mubr.f32.gmra.mxu0 %v265
      %v417 = vpop.f32.mrf.mxu0
      %v418 = vadd.f32 0.0, %v417
      %v419 = vpop.f32.mrf.mxu0
      %v420 = vadd.f32 0.0, %v419
      %421 = vmatprep.mubr.f32.mxu0 0.0
      %422 = vmatmul.mubr.f32.gmra.mxu0 %v268
      %v423 = vpop.f32.mrf.mxu0
      %v424 = vadd.f32 0.0, %v423
      %v425 = vpop.f32.mrf.mxu0
      %v426 = vadd.f32 0.0, %v425
      %427 = vmatprep.mubr.f32.mxu0 0.0
      %428 = vmatmul.mubr.f32.gmra.mxu0 %v271
      %v429 = vpop.f32.mrf.mxu0
      %v430 = vadd.f32 0.0, %v429
      %v431 = vpop.f32.mrf.mxu0
      %v432 = vadd.f32 0.0, %v431
      %433 = vdwg.mxu0
      %v434 = vmul.f32 %v340, 0.5
      %v435 = vmul.f32 %v342, 0.5
      %v436 = vmul.f32 %v346, 0.5
      %v437 = vmul.f32 %v348, 0.5
      %v438 = vmul.f32 %v352, 0.5
      %v439 = vmul.f32 %v354, 0.5
      %v440 = vmul.f32 %v358, 0.5
      %v441 = vmul.f32 %v360, 0.5
      %v442 = vmul.f32 %v364, 0.5
      %v443 = vmul.f32 %v366, 0.5
      %v444 = vmul.f32 %v370, 0.5
      %v445 = vmul.f32 %v372, 0.5
      %v446 = vmul.f32 %v376, 0.5
      %v447 = vmul.f32 %v378, 0.5
      %v448 = vmul.f32 %v382, 0.5
      %v449 = vmul.f32 %v384, 0.5
      %v450 = vmul.f32 %v388, 0.5
      %v451 = vmul.f32 %v390, 0.5
      %v452 = vmul.f32 %v394, 0.5
      %v453 = vmul.f32 %v396, 0.5
      %v454 = vmul.f32 %v400, 0.5
      %v455 = vmul.f32 %v402, 0.5
      %v456 = vmul.f32 %v406, 0.5
      %v457 = vmul.f32 %v408, 0.5
      %v458 = vmul.f32 %v412, 0.5
      %v459 = vmul.f32 %v414, 0.5
      %v460 = vmul.f32 %v418, 0.5
      %v461 = vmul.f32 %v420, 0.5
      %v462 = vmul.f32 %v424, 0.5
      %v463 = vmul.f32 %v426, 0.5
      %v464 = vmul.f32 %v430, 0.5
      %v465 = vmul.f32 %v432, 0.5
      %v466 = vtanh.pop %v434
      %v467 = vtanh.pop %v435
      %v468 = vtanh.pop %v436
      %v469 = vtanh.pop %v437
      %v470 = vtanh.pop %v438
      %v471 = vtanh.pop %v439
      %v472 = vtanh.pop %v440
      %v473 = vtanh.pop %v441
      %v474 = vtanh.pop %v442
      %v475 = vtanh.pop %v443
      %v476 = vtanh.pop %v444
      %v477 = vtanh.pop %v445
      %v478 = vtanh.pop %v446
      %v479 = vtanh.pop %v447
      %v480 = vtanh.pop %v448
      %v481 = vtanh.pop %v449
      %v482 = vtanh.pop %v450
      %v483 = vtanh.pop %v451
      %v484 = vtanh.pop %v452
      %v485 = vtanh.pop %v453
      %v486 = vtanh.pop %v454
      %v487 = vtanh.pop %v455
      %v488 = vtanh.pop %v456
      %v489 = vtanh.pop %v457
      %v490 = vtanh.pop %v458
      %v491 = vtanh.pop %v459
      %v492 = vtanh.pop %v460
      %v493 = vtanh.pop %v461
      %v494 = vtanh.pop %v462
      %v495 = vtanh.pop %v463
      %v496 = vtanh.pop %v464
      %v497 = vtanh.pop %v465
      %v498 = vadd.f32 %v466, 1.0
      %v499 = vadd.f32 %v467, 1.0
      %v500 = vadd.f32 %v468, 1.0
      %v501 = vadd.f32 %v469, 1.0
      %v502 = vadd.f32 %v470, 1.0
      %v503 = vadd.f32 %v471, 1.0
      %v504 = vadd.f32 %v472, 1.0
      %v505 = vadd.f32 %v473, 1.0
      %v506 = vadd.f32 %v474, 1.0
      %v507 = vadd.f32 %v475, 1.0
      %v508 = vadd.f32 %v476, 1.0
      %v509 = vadd.f32 %v477, 1.0
      %v510 = vadd.f32 %v478, 1.0
      %v511 = vadd.f32 %v479, 1.0
      %v512 = vadd.f32 %v480, 1.0
      %v513 = vadd.f32 %v481, 1.0
      %v514 = vadd.f32 %v482, 1.0
      %v515 = vadd.f32 %v483, 1.0
      %v516 = vadd.f32 %v484, 1.0
      %v517 = vadd.f32 %v485, 1.0
      %v518 = vadd.f32 %v486, 1.0
      %v519 = vadd.f32 %v487, 1.0
      %v520 = vadd.f32 %v488, 1.0
      %v521 = vadd.f32 %v489, 1.0
      %v522 = vadd.f32 %v490, 1.0
      %v523 = vadd.f32 %v491, 1.0
      %v524 = vadd.f32 %v492, 1.0
      %v525 = vadd.f32 %v493, 1.0
      %v526 = vadd.f32 %v494, 1.0
      %v527 = vadd.f32 %v495, 1.0
      %v528 = vadd.f32 %v496, 1.0
      %v529 = vadd.f32 %v497, 1.0
      %v530 = vmul.f32 %v340, %v498
      %v531 = vmul.f32 %v342, %v499
      %v532 = vmul.f32 %v346, %v500
      %v533 = vmul.f32 %v348, %v501
      %v534 = vmul.f32 %v352, %v502
      %v535 = vmul.f32 %v354, %v503
      %v536 = vmul.f32 %v358, %v504
      %v537 = vmul.f32 %v360, %v505
      %v538 = vmul.f32 %v364, %v506
      %v539 = vmul.f32 %v366, %v507
      %v540 = vmul.f32 %v370, %v508
      %v541 = vmul.f32 %v372, %v509
      %v542 = vmul.f32 %v376, %v510
      %v543 = vmul.f32 %v378, %v511
      %v544 = vmul.f32 %v382, %v512
      %v545 = vmul.f32 %v384, %v513
      %v546 = vmul.f32 %v388, %v514
      %v547 = vmul.f32 %v390, %v515
      %v548 = vmul.f32 %v394, %v516
      %v549 = vmul.f32 %v396, %v517
      %v550 = vmul.f32 %v400, %v518
      %v551 = vmul.f32 %v402, %v519
      %v552 = vmul.f32 %v406, %v520
      %v553 = vmul.f32 %v408, %v521
      %v554 = vmul.f32 %v412, %v522
      %v555 = vmul.f32 %v414, %v523
      %v556 = vmul.f32 %v418, %v524
      %v557 = vmul.f32 %v420, %v525
      %v558 = vmul.f32 %v424, %v526
      %v559 = vmul.f32 %v426, %v527
      %v560 = vmul.f32 %v430, %v528
      %v561 = vmul.f32 %v432, %v529
      %v562 = vmul.f32 %v530, %v530
      %v563 = vmul.f32 %v531, %v531
      %v564 = vmul.f32 %v532, %v532
      %v565 = vmul.f32 %v533, %v533
      %v566 = vmul.f32 %v534, %v534
      %v567 = vmul.f32 %v535, %v535
      %v568 = vmul.f32 %v536, %v536
      %v569 = vmul.f32 %v537, %v537
      %v570 = vmul.f32 %v538, %v538
      %v571 = vmul.f32 %v539, %v539
      %v572 = vmul.f32 %v540, %v540
      %v573 = vmul.f32 %v541, %v541
      %v574 = vmul.f32 %v542, %v542
      %v575 = vmul.f32 %v543, %v543
      %v576 = vmul.f32 %v544, %v544
      %v577 = vmul.f32 %v545, %v545
      %v578 = vmul.f32 %v546, %v546
      %v579 = vmul.f32 %v547, %v547
      %v580 = vmul.f32 %v548, %v548
      %v581 = vmul.f32 %v549, %v549
      %v582 = vmul.f32 %v550, %v550
      %v583 = vmul.f32 %v551, %v551
      %v584 = vmul.f32 %v552, %v552
      %v585 = vmul.f32 %v553, %v553
      %v586 = vmul.f32 %v554, %v554
      %v587 = vmul.f32 %v555, %v555
      %v588 = vmul.f32 %v556, %v556
      %v589 = vmul.f32 %v557, %v557
      %v590 = vmul.f32 %v558, %v558
      %v591 = vmul.f32 %v559, %v559
      %v592 = vmul.f32 %v560, %v560
      %v593 = vmul.f32 %v561, %v561
      %v594 = vld [vmem:[%s3] sm:$0xff]
      %v595 = vld [vmem:[%s3 + $0x8] sm:$0xff]
      %v596 = vld [vmem:[%s3 + $0x10] sm:$0xff]
      %v597 = vld [vmem:[%s3 + $0x18] sm:$0xff]
      %v598 = vld [vmem:[%s3 + $0x20] sm:$0xff]
      %v599 = vld [vmem:[%s3 + $0x28] sm:$0xff]
      %v600 = vld [vmem:[%s3 + $0x30] sm:$0xff]
      %v601 = vld [vmem:[%s3 + $0x38] sm:$0xff]
      %v602 = vld [vmem:[%s3 + $0x40] sm:$0xff]
      %v603 = vld [vmem:[%s3 + $0x48] sm:$0xff]
      %v604 = vld [vmem:[%s3 + $0x50] sm:$0xff]
      %v605 = vld [vmem:[%s3 + $0x58] sm:$0xff]
      %v606 = vld [vmem:[%s3 + $0x60] sm:$0xff]
      %v607 = vld [vmem:[%s3 + $0x68] sm:$0xff]
      %v608 = vld [vmem:[%s3 + $0x70] sm:$0xff]
      %v609 = vld [vmem:[%s3 + $0x78] sm:$0xff]
      %v610 = vld [vmem:[%s3 + $0x80] sm:$0xff]
      %v611 = vld [vmem:[%s3 + $0x88] sm:$0xff]
      %v612 = vld [vmem:[%s3 + $0x90] sm:$0xff]
      %v613 = vld [vmem:[%s3 + $0x98] sm:$0xff]
      %v614 = vld [vmem:[%s3 + $0xa0] sm:$0xff]
      %v615 = vld [vmem:[%s3 + $0xa8] sm:$0xff]
      %v616 = vld [vmem:[%s3 + $0xb0] sm:$0xff]
      %v617 = vld [vmem:[%s3 + $0xb8] sm:$0xff]
      %v618 = vld [vmem:[%s3 + $0xc0] sm:$0xff]
      %v619 = vld [vmem:[%s3 + $0xc8] sm:$0xff]
      %v620 = vld [vmem:[%s3 + $0xd0] sm:$0xff]
      %v621 = vld [vmem:[%s3 + $0xd8] sm:$0xff]
      %v622 = vld [vmem:[%s3 + $0xe0] sm:$0xff]
      %v623 = vld [vmem:[%s3 + $0xe8] sm:$0xff]
      %v624 = vld [vmem:[%s3 + $0xf0] sm:$0xff]
      %v625 = vld [vmem:[%s3 + $0xf8] sm:$0xff]
      %626 = vmatprep.subr.mxu0 0.0
      %627 = vmatpush1.msra.mxu0 %v609
      %628 = vmatprep.subr.mxu0 0.0
      %629 = vmatpush1.msra.mxu0 %v608
      %630 = vmatprep.subr.mxu0 0.0
      %631 = vmatpush1.msra.mxu0 %v607
      %632 = vmatprep.subr.mxu0 0.0
      %633 = vmatpush1.msra.mxu0 %v606
      %634 = vmatprep.subr.mxu0 0.0
      %635 = vmatpush1.msra.mxu0 %v605
      %636 = vmatprep.subr.mxu0 0.0
      %637 = vmatpush1.msra.mxu0 %v604
      %638 = vmatprep.subr.mxu0 0.0
      %639 = vmatpush1.msra.mxu0 %v603
      %640 = vmatprep.subr.mxu0 0.0
      %641 = vmatpush1.msra.mxu0 %v602
      %642 = vmatprep.subr.mxu0 0.0
      %643 = vmatpush1.msra.mxu0 %v601
      %644 = vmatprep.subr.mxu0 0.0
      %645 = vmatpush1.msra.mxu0 %v600
      %646 = vmatprep.subr.mxu0 0.0
      %647 = vmatpush1.msra.mxu0 %v599
      %648 = vmatprep.subr.mxu0 0.0
      %649 = vmatpush1.msra.mxu0 %v598
      %650 = vmatprep.subr.mxu0 0.0
      %651 = vmatpush1.msra.mxu0 %v597
      %652 = vmatprep.subr.mxu0 0.0
      %653 = vmatpush1.msra.mxu0 %v596
      %654 = vmatprep.subr.mxu0 0.0
      %655 = vmatpush1.msra.mxu0 %v595
      %656 = vmatprep.subr.mxu0 0.0
      %657 = vmatpush1.msra.mxu0 %v594
      %658 = vmatprep.subr.mxu0 0.0
      %659 = vmatpush2.msra.mxu0 %v625
      %660 = vmatprep.subr.mxu0 0.0
      %661 = vmatpush2.msra.mxu0 %v624
      %662 = vmatprep.subr.mxu0 0.0
      %663 = vmatpush2.msra.mxu0 %v623
      %664 = vmatprep.subr.mxu0 0.0
      %665 = vmatpush2.msra.mxu0 %v622
      %666 = vmatprep.subr.mxu0 0.0
      %667 = vmatpush2.msra.mxu0 %v621
      %668 = vmatprep.subr.mxu0 0.0
      %669 = vmatpush2.msra.mxu0 %v620
      %670 = vmatprep.subr.mxu0 0.0
      %671 = vmatpush2.msra.mxu0 %v619
      %672 = vmatprep.subr.mxu0 0.0
      %673 = vmatpush2.msra.mxu0 %v618
      %674 = vmatprep.subr.mxu0 0.0
      %675 = vmatpush2.msra.mxu0 %v617
      %676 = vmatprep.subr.mxu0 0.0
      %677 = vmatpush2.msra.mxu0 %v616
      %678 = vmatprep.subr.mxu0 0.0
      %679 = vmatpush2.msra.mxu0 %v615
      %680 = vmatprep.subr.mxu0 0.0
      %681 = vmatpush2.msra.mxu0 %v614
      %682 = vmatprep.subr.mxu0 0.0
      %683 = vmatpush2.msra.mxu0 %v613
      %684 = vmatprep.subr.mxu0 0.0
      %685 = vmatpush2.msra.mxu0 %v612
      %686 = vmatprep.subr.mxu0 0.0
      %687 = vmatpush2.msra.mxu0 %v611
      %688 = vmatprep.subr.mxu0 0.0
      %689 = vmatpush2.msra.mxu0 %v610
      %690 = vmatprep.mubr.f32.mxu0 %v563
      %691 = vmatmul.mubr.f32.gmra.mxu0 %v562
      %v692 = vpop.f32.mrf.mxu0
      %v693 = vadd.f32 0.0, %v692
      %v694 = vpop.f32.mrf.mxu0
      %695 = vmatprep.mubr.f32.mxu0 %v565
      %696 = vmatmul.mubr.f32.gmra.mxu0 %v564
      %v697 = vpop.f32.mrf.mxu0
      %v698 = vadd.f32 0.0, %v697
      %v699 = vpop.f32.mrf.mxu0
      %700 = vmatprep.mubr.f32.mxu0 %v567
      %701 = vmatmul.mubr.f32.gmra.mxu0 %v566
      %v702 = vpop.f32.mrf.mxu0
      %v703 = vadd.f32 0.0, %v702
      %v704 = vpop.f32.mrf.mxu0
      %705 = vmatprep.mubr.f32.mxu0 %v569
      %706 = vmatmul.mubr.f32.gmra.mxu0 %v568
      %v707 = vpop.f32.mrf.mxu0
      %v708 = vadd.f32 0.0, %v707
      %v709 = vpop.f32.mrf.mxu0
      %710 = vmatprep.mubr.f32.mxu0 %v571
      %711 = vmatmul.mubr.f32.gmra.mxu0 %v570
      %v712 = vpop.f32.mrf.mxu0
      %v713 = vadd.f32 0.0, %v712
      %v714 = vpop.f32.mrf.mxu0
      %715 = vmatprep.mubr.f32.mxu0 %v573
      %716 = vmatmul.mubr.f32.gmra.mxu0 %v572
      %v717 = vpop.f32.mrf.mxu0
      %v718 = vadd.f32 0.0, %v717
      %v719 = vpop.f32.mrf.mxu0
      %720 = vmatprep.mubr.f32.mxu0 %v575
      %721 = vmatmul.mubr.f32.gmra.mxu0 %v574
      %v722 = vpop.f32.mrf.mxu0
      %v723 = vadd.f32 0.0, %v722
      %v724 = vpop.f32.mrf.mxu0
      %725 = vmatprep.mubr.f32.mxu0 %v577
      %726 = vmatmul.mubr.f32.gmra.mxu0 %v576
      %v727 = vpop.f32.mrf.mxu0
      %v728 = vadd.f32 0.0, %v727
      %v729 = vpop.f32.mrf.mxu0
      %730 = vmatprep.mubr.f32.mxu0 %v579
      %731 = vmatmul.mubr.f32.gmra.mxu0 %v578
      %v732 = vpop.f32.mrf.mxu0
      %v733 = vadd.f32 0.0, %v732
      %v734 = vpop.f32.mrf.mxu0
      %735 = vmatprep.mubr.f32.mxu0 %v581
      %736 = vmatmul.mubr.f32.gmra.mxu0 %v580
      %v737 = vpop.f32.mrf.mxu0
      %v738 = vadd.f32 0.0, %v737
      %v739 = vpop.f32.mrf.mxu0
      %740 = vmatprep.mubr.f32.mxu0 %v583
      %741 = vmatmul.mubr.f32.gmra.mxu0 %v582
      %v742 = vpop.f32.mrf.mxu0
      %v743 = vadd.f32 0.0, %v742
      %v744 = vpop.f32.mrf.mxu0
      %745 = vmatprep.mubr.f32.mxu0 %v585
      %746 = vmatmul.mubr.f32.gmra.mxu0 %v584
      %v747 = vpop.f32.mrf.mxu0
      %v748 = vadd.f32 0.0, %v747
      %v749 = vpop.f32.mrf.mxu0
      %750 = vmatprep.mubr.f32.mxu0 %v587
      %751 = vmatmul.mubr.f32.gmra.mxu0 %v586
      %v752 = vpop.f32.mrf.mxu0
      %v753 = vadd.f32 0.0, %v752
      %v754 = vpop.f32.mrf.mxu0
      %755 = vmatprep.mubr.f32.mxu0 %v589
      %756 = vmatmul.mubr.f32.gmra.mxu0 %v588
      %v757 = vpop.f32.mrf.mxu0
      %v758 = vadd.f32 0.0, %v757
      %v759 = vpop.f32.mrf.mxu0
      %760 = vmatprep.mubr.f32.mxu0 %v591
      %761 = vmatmul.mubr.f32.gmra.mxu0 %v590
      %v762 = vpop.f32.mrf.mxu0
      %v763 = vadd.f32 0.0, %v762
      %v764 = vpop.f32.mrf.mxu0
      %765 = vmatprep.mubr.f32.mxu0 %v593
      %766 = vmatmul.mubr.f32.gmra.mxu0 %v592
      %v767 = vpop.f32.mrf.mxu0
      %v768 = vadd.f32 0.0, %v767
      %v769 = vpop.f32.mrf.mxu0
      %770 = vdwg.mxu0
      %s771 = scalar_lea.vmem %s3, 256
      %v772 = vld [vmem:[%s771] sm:$0xff]
      %v773 = vld [vmem:[%s771 + $0x8] sm:$0xff]
      %v774 = vld [vmem:[%s771 + $0x10] sm:$0xff]
      %v775 = vld [vmem:[%s771 + $0x18] sm:$0xff]
      %v776 = vld [vmem:[%s771 + $0x20] sm:$0xff]
      %v777 = vld [vmem:[%s771 + $0x28] sm:$0xff]
      %v778 = vld [vmem:[%s771 + $0x30] sm:$0xff]
      %v779 = vld [vmem:[%s771 + $0x38] sm:$0xff]
      %v780 = vld [vmem:[%s771 + $0x40] sm:$0xff]
      %v781 = vld [vmem:[%s771 + $0x48] sm:$0xff]
      %v782 = vld [vmem:[%s771 + $0x50] sm:$0xff]
      %v783 = vld [vmem:[%s771 + $0x58] sm:$0xff]
      %v784 = vld [vmem:[%s771 + $0x60] sm:$0xff]
      %v785 = vld [vmem:[%s771 + $0x68] sm:$0xff]
      %v786 = vld [vmem:[%s771 + $0x70] sm:$0xff]
      %v787 = vld [vmem:[%s771 + $0x78] sm:$0xff]
      %v788 = vld [vmem:[%s771 + $0x80] sm:$0xff]
      %v789 = vld [vmem:[%s771 + $0x88] sm:$0xff]
      %v790 = vld [vmem:[%s771 + $0x90] sm:$0xff]
      %v791 = vld [vmem:[%s771 + $0x98] sm:$0xff]
      %v792 = vld [vmem:[%s771 + $0xa0] sm:$0xff]
      %v793 = vld [vmem:[%s771 + $0xa8] sm:$0xff]
      %v794 = vld [vmem:[%s771 + $0xb0] sm:$0xff]
      %v795 = vld [vmem:[%s771 + $0xb8] sm:$0xff]
      %v796 = vld [vmem:[%s771 + $0xc0] sm:$0xff]
      %v797 = vld [vmem:[%s771 + $0xc8] sm:$0xff]
      %v798 = vld [vmem:[%s771 + $0xd0] sm:$0xff]
      %v799 = vld [vmem:[%s771 + $0xd8] sm:$0xff]
      %v800 = vld [vmem:[%s771 + $0xe0] sm:$0xff]
      %v801 = vld [vmem:[%s771 + $0xe8] sm:$0xff]
      %v802 = vld [vmem:[%s771 + $0xf0] sm:$0xff]
      %v803 = vld [vmem:[%s771 + $0xf8] sm:$0xff]
      %804 = vmatprep.subr.mxu0 0.0
      %805 = vmatpush1.msra.mxu0 %v787
      %806 = vmatprep.subr.mxu0 0.0
      %807 = vmatpush1.msra.mxu0 %v786
      %808 = vmatprep.subr.mxu0 0.0
      %809 = vmatpush1.msra.mxu0 %v785
      %810 = vmatprep.subr.mxu0 0.0
      %811 = vmatpush1.msra.mxu0 %v784
      %812 = vmatprep.subr.mxu0 0.0
      %813 = vmatpush1.msra.mxu0 %v783
      %814 = vmatprep.subr.mxu0 0.0
      %815 = vmatpush1.msra.mxu0 %v782
      %816 = vmatprep.subr.mxu0 0.0
      %817 = vmatpush1.msra.mxu0 %v781
      %818 = vmatprep.subr.mxu0 0.0
      %819 = vmatpush1.msra.mxu0 %v780
      %820 = vmatprep.subr.mxu0 0.0
      %821 = vmatpush1.msra.mxu0 %v779
      %822 = vmatprep.subr.mxu0 0.0
      %823 = vmatpush1.msra.mxu0 %v778
      %824 = vmatprep.subr.mxu0 0.0
      %825 = vmatpush1.msra.mxu0 %v777
      %826 = vmatprep.subr.mxu0 0.0
      %827 = vmatpush1.msra.mxu0 %v776
      %828 = vmatprep.subr.mxu0 0.0
      %829 = vmatpush1.msra.mxu0 %v775
      %830 = vmatprep.subr.mxu0 0.0
      %831 = vmatpush1.msra.mxu0 %v774
      %832 = vmatprep.subr.mxu0 0.0
      %833 = vmatpush1.msra.mxu0 %v773
      %834 = vmatprep.subr.mxu0 0.0
      %835 = vmatpush1.msra.mxu0 %v772
      %836 = vmatprep.subr.mxu0 0.0
      %837 = vmatpush2.msra.mxu0 %v803
      %838 = vmatprep.subr.mxu0 0.0
      %839 = vmatpush2.msra.mxu0 %v802
      %840 = vmatprep.subr.mxu0 0.0
      %841 = vmatpush2.msra.mxu0 %v801
      %842 = vmatprep.subr.mxu0 0.0
      %843 = vmatpush2.msra.mxu0 %v800
      %844 = vmatprep.subr.mxu0 0.0
      %845 = vmatpush2.msra.mxu0 %v799
      %846 = vmatprep.subr.mxu0 0.0
      %847 = vmatpush2.msra.mxu0 %v798
      %848 = vmatprep.subr.mxu0 0.0
      %849 = vmatpush2.msra.mxu0 %v797
      %850 = vmatprep.subr.mxu0 0.0
      %851 = vmatpush2.msra.mxu0 %v796
      %852 = vmatprep.subr.mxu0 0.0
      %853 = vmatpush2.msra.mxu0 %v795
      %854 = vmatprep.subr.mxu0 0.0
      %855 = vmatpush2.msra.mxu0 %v794
      %856 = vmatprep.subr.mxu0 0.0
      %857 = vmatpush2.msra.mxu0 %v793
      %858 = vmatprep.subr.mxu0 0.0
      %859 = vmatpush2.msra.mxu0 %v792
      %860 = vmatprep.subr.mxu0 0.0
      %861 = vmatpush2.msra.mxu0 %v791
      %862 = vmatprep.subr.mxu0 0.0
      %863 = vmatpush2.msra.mxu0 %v790
      %864 = vmatprep.subr.mxu0 0.0
      %865 = vmatpush2.msra.mxu0 %v789
      %866 = vmatprep.subr.mxu0 0.0
      %867 = vmatpush2.msra.mxu0 %v788
      %868 = vmatprep.mubr.f32.mxu0 %v563
      %869 = vmatmul.mubr.f32.gmra.mxu0 %v562
      %v870 = vpop.f32.mrf.mxu0
      %v871 = vadd.f32 0.0, %v870
      %v872 = vpop.f32.mrf.mxu0
      %873 = vmatprep.mubr.f32.mxu0 %v565
      %874 = vmatmul.mubr.f32.gmra.mxu0 %v564
      %v875 = vpop.f32.mrf.mxu0
      %v876 = vadd.f32 0.0, %v875
      %v877 = vpop.f32.mrf.mxu0
      %878 = vmatprep.mubr.f32.mxu0 %v567
      %879 = vmatmul.mubr.f32.gmra.mxu0 %v566
      %v880 = vpop.f32.mrf.mxu0
      %v881 = vadd.f32 0.0, %v880
      %v882 = vpop.f32.mrf.mxu0
      %883 = vmatprep.mubr.f32.mxu0 %v569
      %884 = vmatmul.mubr.f32.gmra.mxu0 %v568
      %v885 = vpop.f32.mrf.mxu0
      %v886 = vadd.f32 0.0, %v885
      %v887 = vpop.f32.mrf.mxu0
      %888 = vmatprep.mubr.f32.mxu0 %v571
      %889 = vmatmul.mubr.f32.gmra.mxu0 %v570
      %v890 = vpop.f32.mrf.mxu0
      %v891 = vadd.f32 0.0, %v890
      %v892 = vpop.f32.mrf.mxu0
      %893 = vmatprep.mubr.f32.mxu0 %v573
      %894 = vmatmul.mubr.f32.gmra.mxu0 %v572
      %v895 = vpop.f32.mrf.mxu0
      %v896 = vadd.f32 0.0, %v895
      %v897 = vpop.f32.mrf.mxu0
      %898 = vmatprep.mubr.f32.mxu0 %v575
      %899 = vmatmul.mubr.f32.gmra.mxu0 %v574
      %v900 = vpop.f32.mrf.mxu0
      %v901 = vadd.f32 0.0, %v900
      %v902 = vpop.f32.mrf.mxu0
      %903 = vmatprep.mubr.f32.mxu0 %v577
      %904 = vmatmul.mubr.f32.gmra.mxu0 %v576
      %v905 = vpop.f32.mrf.mxu0
      %v906 = vadd.f32 0.0, %v905
      %v907 = vpop.f32.mrf.mxu0
      %908 = vmatprep.mubr.f32.mxu0 %v579
      %909 = vmatmul.mubr.f32.gmra.mxu0 %v578
      %v910 = vpop.f32.mrf.mxu0
      %v911 = vadd.f32 0.0, %v910
      %v912 = vpop.f32.mrf.mxu0
      %913 = vmatprep.mubr.f32.mxu0 %v581
      %914 = vmatmul.mubr.f32.gmra.mxu0 %v580
      %v915 = vpop.f32.mrf.mxu0
      %v916 = vadd.f32 0.0, %v915
      %v917 = vpop.f32.mrf.mxu0
      %918 = vmatprep.mubr.f32.mxu0 %v583
      %919 = vmatmul.mubr.f32.gmra.mxu0 %v582
      %v920 = vpop.f32.mrf.mxu0
      %v921 = vadd.f32 0.0, %v920
      %v922 = vpop.f32.mrf.mxu0
      %923 = vmatprep.mubr.f32.mxu0 %v585
      %924 = vmatmul.mubr.f32.gmra.mxu0 %v584
      %v925 = vpop.f32.mrf.mxu0
      %v926 = vadd.f32 0.0, %v925
      %v927 = vpop.f32.mrf.mxu0
      %928 = vmatprep.mubr.f32.mxu0 %v587
      %929 = vmatmul.mubr.f32.gmra.mxu0 %v586
      %v930 = vpop.f32.mrf.mxu0
      %v931 = vadd.f32 0.0, %v930
      %v932 = vpop.f32.mrf.mxu0
      %933 = vmatprep.mubr.f32.mxu0 %v589
      %934 = vmatmul.mubr.f32.gmra.mxu0 %v588
      %v935 = vpop.f32.mrf.mxu0
      %v936 = vadd.f32 0.0, %v935
      %v937 = vpop.f32.mrf.mxu0
      %938 = vmatprep.mubr.f32.mxu0 %v591
      %939 = vmatmul.mubr.f32.gmra.mxu0 %v590
      %v940 = vpop.f32.mrf.mxu0
      %v941 = vadd.f32 0.0, %v940
      %v942 = vpop.f32.mrf.mxu0
      %943 = vmatprep.mubr.f32.mxu0 %v593
      %944 = vmatmul.mubr.f32.gmra.mxu0 %v592
      %v945 = vpop.f32.mrf.mxu0
      %v946 = vadd.f32 0.0, %v945
      %v947 = vpop.f32.mrf.mxu0
      %948 = vdwg.mxu0
      %s949 = scalar_lea.vmem %s3, 512
      %v950 = vld [vmem:[%s949] sm:$0xff]
      %v951 = vld [vmem:[%s949 + $0x8] sm:$0xff]
      %v952 = vld [vmem:[%s949 + $0x10] sm:$0xff]
      %v953 = vld [vmem:[%s949 + $0x18] sm:$0xff]
      %v954 = vld [vmem:[%s949 + $0x20] sm:$0xff]
      %v955 = vld [vmem:[%s949 + $0x28] sm:$0xff]
      %v956 = vld [vmem:[%s949 + $0x30] sm:$0xff]
      %v957 = vld [vmem:[%s949 + $0x38] sm:$0xff]
      %v958 = vld [vmem:[%s949 + $0x40] sm:$0xff]
      %v959 = vld [vmem:[%s949 + $0x48] sm:$0xff]
      %v960 = vld [vmem:[%s949 + $0x50] sm:$0xff]
      %v961 = vld [vmem:[%s949 + $0x58] sm:$0xff]
      %v962 = vld [vmem:[%s949 + $0x60] sm:$0xff]
      %v963 = vld [vmem:[%s949 + $0x68] sm:$0xff]
      %v964 = vld [vmem:[%s949 + $0x70] sm:$0xff]
      %v965 = vld [vmem:[%s949 + $0x78] sm:$0xff]
      %v966 = vld [vmem:[%s949 + $0x80] sm:$0xff]
      %v967 = vld [vmem:[%s949 + $0x88] sm:$0xff]
      %v968 = vld [vmem:[%s949 + $0x90] sm:$0xff]
      %v969 = vld [vmem:[%s949 + $0x98] sm:$0xff]
      %v970 = vld [vmem:[%s949 + $0xa0] sm:$0xff]
      %v971 = vld [vmem:[%s949 + $0xa8] sm:$0xff]
      %v972 = vld [vmem:[%s949 + $0xb0] sm:$0xff]
      %v973 = vld [vmem:[%s949 + $0xb8] sm:$0xff]
      %v974 = vld [vmem:[%s949 + $0xc0] sm:$0xff]
      %v975 = vld [vmem:[%s949 + $0xc8] sm:$0xff]
      %v976 = vld [vmem:[%s949 + $0xd0] sm:$0xff]
      %v977 = vld [vmem:[%s949 + $0xd8] sm:$0xff]
      %v978 = vld [vmem:[%s949 + $0xe0] sm:$0xff]
      %v979 = vld [vmem:[%s949 + $0xe8] sm:$0xff]
      %v980 = vld [vmem:[%s949 + $0xf0] sm:$0xff]
      %v981 = vld [vmem:[%s949 + $0xf8] sm:$0xff]
      %982 = vmatprep.subr.mxu0 0.0
      %983 = vmatpush1.msra.mxu0 %v965
      %984 = vmatprep.subr.mxu0 0.0
      %985 = vmatpush1.msra.mxu0 %v964
      %986 = vmatprep.subr.mxu0 0.0
      %987 = vmatpush1.msra.mxu0 %v963
      %988 = vmatprep.subr.mxu0 0.0
      %989 = vmatpush1.msra.mxu0 %v962
      %990 = vmatprep.subr.mxu0 0.0
      %991 = vmatpush1.msra.mxu0 %v961
      %992 = vmatprep.subr.mxu0 0.0
      %993 = vmatpush1.msra.mxu0 %v960
      %994 = vmatprep.subr.mxu0 0.0
      %995 = vmatpush1.msra.mxu0 %v959
      %996 = vmatprep.subr.mxu0 0.0
      %997 = vmatpush1.msra.mxu0 %v958
      %998 = vmatprep.subr.mxu0 0.0
      %999 = vmatpush1.msra.mxu0 %v957
      %1000 = vmatprep.subr.mxu0 0.0
      %1001 = vmatpush1.msra.mxu0 %v956
      %1002 = vmatprep.subr.mxu0 0.0
      %1003 = vmatpush1.msra.mxu0 %v955
      %1004 = vmatprep.subr.mxu0 0.0
      %1005 = vmatpush1.msra.mxu0 %v954
      %1006 = vmatprep.subr.mxu0 0.0
      %1007 = vmatpush1.msra.mxu0 %v953
      %1008 = vmatprep.subr.mxu0 0.0
      %1009 = vmatpush1.msra.mxu0 %v952
      %1010 = vmatprep.subr.mxu0 0.0
      %1011 = vmatpush1.msra.mxu0 %v951
      %1012 = vmatprep.subr.mxu0 0.0
      %1013 = vmatpush1.msra.mxu0 %v950
      %1014 = vmatprep.subr.mxu0 0.0
      %1015 = vmatpush2.msra.mxu0 %v981
      %1016 = vmatprep.subr.mxu0 0.0
      %1017 = vmatpush2.msra.mxu0 %v980
      %1018 = vmatprep.subr.mxu0 0.0
      %1019 = vmatpush2.msra.mxu0 %v979
      %1020 = vmatprep.subr.mxu0 0.0
      %1021 = vmatpush2.msra.mxu0 %v978
      %1022 = vmatprep.subr.mxu0 0.0
      %1023 = vmatpush2.msra.mxu0 %v977
      %1024 = vmatprep.subr.mxu0 0.0
      %1025 = vmatpush2.msra.mxu0 %v976
      %1026 = vmatprep.subr.mxu0 0.0
      %1027 = vmatpush2.msra.mxu0 %v975
      %1028 = vmatprep.subr.mxu0 0.0
      %1029 = vmatpush2.msra.mxu0 %v974
      %1030 = vmatprep.subr.mxu0 0.0
      %1031 = vmatpush2.msra.mxu0 %v973
      %1032 = vmatprep.subr.mxu0 0.0
      %1033 = vmatpush2.msra.mxu0 %v972
      %1034 = vmatprep.subr.mxu0 0.0
      %1035 = vmatpush2.msra.mxu0 %v971
      %1036 = vmatprep.subr.mxu0 0.0
      %1037 = vmatpush2.msra.mxu0 %v970
      %1038 = vmatprep.subr.mxu0 0.0
      %1039 = vmatpush2.msra.mxu0 %v969
      %1040 = vmatprep.subr.mxu0 0.0
      %1041 = vmatpush2.msra.mxu0 %v968
      %1042 = vmatprep.subr.mxu0 0.0
      %1043 = vmatpush2.msra.mxu0 %v967
      %1044 = vmatprep.subr.mxu0 0.0
      %1045 = vmatpush2.msra.mxu0 %v966
      %1046 = vmatprep.mubr.f32.mxu0 %v563
      %1047 = vmatmul.mubr.f32.gmra.mxu0 %v562
      %v1048 = vpop.f32.mrf.mxu0
      %v1049 = vadd.f32 0.0, %v1048
      %v1050 = vpop.f32.mrf.mxu0
      %1051 = vmatprep.mubr.f32.mxu0 %v565
      %1052 = vmatmul.mubr.f32.gmra.mxu0 %v564
      %v1053 = vpop.f32.mrf.mxu0
      %v1054 = vadd.f32 0.0, %v1053
      %v1055 = vpop.f32.mrf.mxu0
      %1056 = vmatprep.mubr.f32.mxu0 %v567
      %1057 = vmatmul.mubr.f32.gmra.mxu0 %v566
      %v1058 = vpop.f32.mrf.mxu0
      %v1059 = vadd.f32 0.0, %v1058
      %v1060 = vpop.f32.mrf.mxu0
      %1061 = vmatprep.mubr.f32.mxu0 %v569
      %1062 = vmatmul.mubr.f32.gmra.mxu0 %v568
      %v1063 = vpop.f32.mrf.mxu0
      %v1064 = vadd.f32 0.0, %v1063
      %v1065 = vpop.f32.mrf.mxu0
      %1066 = vmatprep.mubr.f32.mxu0 %v571
      %1067 = vmatmul.mubr.f32.gmra.mxu0 %v570
      %v1068 = vpop.f32.mrf.mxu0
      %v1069 = vadd.f32 0.0, %v1068
      %v1070 = vpop.f32.mrf.mxu0
      %1071 = vmatprep.mubr.f32.mxu0 %v573
      %1072 = vmatmul.mubr.f32.gmra.mxu0 %v572
      %v1073 = vpop.f32.mrf.mxu0
      %v1074 = vadd.f32 0.0, %v1073
      %v1075 = vpop.f32.mrf.mxu0
      %1076 = vmatprep.mubr.f32.mxu0 %v575
      %1077 = vmatmul.mubr.f32.gmra.mxu0 %v574
      %v1078 = vpop.f32.mrf.mxu0
      %v1079 = vadd.f32 0.0, %v1078
      %v1080 = vpop.f32.mrf.mxu0
      %1081 = vmatprep.mubr.f32.mxu0 %v577
      %1082 = vmatmul.mubr.f32.gmra.mxu0 %v576
      %v1083 = vpop.f32.mrf.mxu0
      %v1084 = vadd.f32 0.0, %v1083
      %v1085 = vpop.f32.mrf.mxu0
      %1086 = vmatprep.mubr.f32.mxu0 %v579
      %1087 = vmatmul.mubr.f32.gmra.mxu0 %v578
      %v1088 = vpop.f32.mrf.mxu0
      %v1089 = vadd.f32 0.0, %v1088
      %v1090 = vpop.f32.mrf.mxu0
      %1091 = vmatprep.mubr.f32.mxu0 %v581
      %1092 = vmatmul.mubr.f32.gmra.mxu0 %v580
      %v1093 = vpop.f32.mrf.mxu0
      %v1094 = vadd.f32 0.0, %v1093
      %v1095 = vpop.f32.mrf.mxu0
      %1096 = vmatprep.mubr.f32.mxu0 %v583
      %1097 = vmatmul.mubr.f32.gmra.mxu0 %v582
      %v1098 = vpop.f32.mrf.mxu0
      %v1099 = vadd.f32 0.0, %v1098
      %v1100 = vpop.f32.mrf.mxu0
      %1101 = vmatprep.mubr.f32.mxu0 %v585
      %1102 = vmatmul.mubr.f32.gmra.mxu0 %v584
      %v1103 = vpop.f32.mrf.mxu0
      %v1104 = vadd.f32 0.0, %v1103
      %v1105 = vpop.f32.mrf.mxu0
      %1106 = vmatprep.mubr.f32.mxu0 %v587
      %1107 = vmatmul.mubr.f32.gmra.mxu0 %v586
      %v1108 = vpop.f32.mrf.mxu0
      %v1109 = vadd.f32 0.0, %v1108
      %v1110 = vpop.f32.mrf.mxu0
      %1111 = vmatprep.mubr.f32.mxu0 %v589
      %1112 = vmatmul.mubr.f32.gmra.mxu0 %v588
      %v1113 = vpop.f32.mrf.mxu0
      %v1114 = vadd.f32 0.0, %v1113
      %v1115 = vpop.f32.mrf.mxu0
      %1116 = vmatprep.mubr.f32.mxu0 %v591
      %1117 = vmatmul.mubr.f32.gmra.mxu0 %v590
      %v1118 = vpop.f32.mrf.mxu0
      %v1119 = vadd.f32 0.0, %v1118
      %v1120 = vpop.f32.mrf.mxu0
      %1121 = vmatprep.mubr.f32.mxu0 %v593
      %1122 = vmatmul.mubr.f32.gmra.mxu0 %v592
      %v1123 = vpop.f32.mrf.mxu0
      %v1124 = vadd.f32 0.0, %v1123
      %v1125 = vpop.f32.mrf.mxu0
      %1126 = vdwg.mxu0
      %s1127 = scalar_lea.vmem %s3, 768
      %v1128 = vld [vmem:[%s1127] sm:$0xff]
      %v1129 = vld [vmem:[%s1127 + $0x8] sm:$0xff]
      %v1130 = vld [vmem:[%s1127 + $0x10] sm:$0xff]
      %v1131 = vld [vmem:[%s1127 + $0x18] sm:$0xff]
      %v1132 = vld [vmem:[%s1127 + $0x20] sm:$0xff]
      %v1133 = vld [vmem:[%s1127 + $0x28] sm:$0xff]
      %v1134 = vld [vmem:[%s1127 + $0x30] sm:$0xff]
      %v1135 = vld [vmem:[%s1127 + $0x38] sm:$0xff]
      %v1136 = vld [vmem:[%s1127 + $0x40] sm:$0xff]
      %v1137 = vld [vmem:[%s1127 + $0x48] sm:$0xff]
      %v1138 = vld [vmem:[%s1127 + $0x50] sm:$0xff]
      %v1139 = vld [vmem:[%s1127 + $0x58] sm:$0xff]
      %v1140 = vld [vmem:[%s1127 + $0x60] sm:$0xff]
      %v1141 = vld [vmem:[%s1127 + $0x68] sm:$0xff]
      %v1142 = vld [vmem:[%s1127 + $0x70] sm:$0xff]
      %v1143 = vld [vmem:[%s1127 + $0x78] sm:$0xff]
      %v1144 = vld [vmem:[%s1127 + $0x80] sm:$0xff]
      %v1145 = vld [vmem:[%s1127 + $0x88] sm:$0xff]
      %v1146 = vld [vmem:[%s1127 + $0x90] sm:$0xff]
      %v1147 = vld [vmem:[%s1127 + $0x98] sm:$0xff]
      %v1148 = vld [vmem:[%s1127 + $0xa0] sm:$0xff]
      %v1149 = vld [vmem:[%s1127 + $0xa8] sm:$0xff]
      %v1150 = vld [vmem:[%s1127 + $0xb0] sm:$0xff]
      %v1151 = vld [vmem:[%s1127 + $0xb8] sm:$0xff]
      %v1152 = vld [vmem:[%s1127 + $0xc0] sm:$0xff]
      %v1153 = vld [vmem:[%s1127 + $0xc8] sm:$0xff]
      %v1154 = vld [vmem:[%s1127 + $0xd0] sm:$0xff]
      %v1155 = vld [vmem:[%s1127 + $0xd8] sm:$0xff]
      %v1156 = vld [vmem:[%s1127 + $0xe0] sm:$0xff]
      %v1157 = vld [vmem:[%s1127 + $0xe8] sm:$0xff]
      %v1158 = vld [vmem:[%s1127 + $0xf0] sm:$0xff]
      %v1159 = vld [vmem:[%s1127 + $0xf8] sm:$0xff]
      %1160 = vmatprep.subr.mxu0 0.0
      %1161 = vmatpush1.msra.mxu0 %v1143
      %1162 = vmatprep.subr.mxu0 0.0
      %1163 = vmatpush1.msra.mxu0 %v1142
      %1164 = vmatprep.subr.mxu0 0.0
      %1165 = vmatpush1.msra.mxu0 %v1141
      %1166 = vmatprep.subr.mxu0 0.0
      %1167 = vmatpush1.msra.mxu0 %v1140
      %1168 = vmatprep.subr.mxu0 0.0
      %1169 = vmatpush1.msra.mxu0 %v1139
      %1170 = vmatprep.subr.mxu0 0.0
      %1171 = vmatpush1.msra.mxu0 %v1138
      %1172 = vmatprep.subr.mxu0 0.0
      %1173 = vmatpush1.msra.mxu0 %v1137
      %1174 = vmatprep.subr.mxu0 0.0
      %1175 = vmatpush1.msra.mxu0 %v1136
      %1176 = vmatprep.subr.mxu0 0.0
      %1177 = vmatpush1.msra.mxu0 %v1135
      %1178 = vmatprep.subr.mxu0 0.0
      %1179 = vmatpush1.msra.mxu0 %v1134
      %1180 = vmatprep.subr.mxu0 0.0
      %1181 = vmatpush1.msra.mxu0 %v1133
      %1182 = vmatprep.subr.mxu0 0.0
      %1183 = vmatpush1.msra.mxu0 %v1132
      %1184 = vmatprep.subr.mxu0 0.0
      %1185 = vmatpush1.msra.mxu0 %v1131
      %1186 = vmatprep.subr.mxu0 0.0
      %1187 = vmatpush1.msra.mxu0 %v1130
      %1188 = vmatprep.subr.mxu0 0.0
      %1189 = vmatpush1.msra.mxu0 %v1129
      %1190 = vmatprep.subr.mxu0 0.0
      %1191 = vmatpush1.msra.mxu0 %v1128
      %1192 = vmatprep.subr.mxu0 0.0
      %1193 = vmatpush2.msra.mxu0 %v1159
      %1194 = vmatprep.subr.mxu0 0.0
      %1195 = vmatpush2.msra.mxu0 %v1158
      %1196 = vmatprep.subr.mxu0 0.0
      %1197 = vmatpush2.msra.mxu0 %v1157
      %1198 = vmatprep.subr.mxu0 0.0
      %1199 = vmatpush2.msra.mxu0 %v1156
      %1200 = vmatprep.subr.mxu0 0.0
      %1201 = vmatpush2.msra.mxu0 %v1155
      %1202 = vmatprep.subr.mxu0 0.0
      %1203 = vmatpush2.msra.mxu0 %v1154
      %1204 = vmatprep.subr.mxu0 0.0
      %1205 = vmatpush2.msra.mxu0 %v1153
      %1206 = vmatprep.subr.mxu0 0.0
      %1207 = vmatpush2.msra.mxu0 %v1152
      %1208 = vmatprep.subr.mxu0 0.0
      %1209 = vmatpush2.msra.mxu0 %v1151
      %1210 = vmatprep.subr.mxu0 0.0
      %1211 = vmatpush2.msra.mxu0 %v1150
      %1212 = vmatprep.subr.mxu0 0.0
      %1213 = vmatpush2.msra.mxu0 %v1149
      %1214 = vmatprep.subr.mxu0 0.0
      %1215 = vmatpush2.msra.mxu0 %v1148
      %1216 = vmatprep.subr.mxu0 0.0
      %1217 = vmatpush2.msra.mxu0 %v1147
      %1218 = vmatprep.subr.mxu0 0.0
      %1219 = vmatpush2.msra.mxu0 %v1146
      %1220 = vmatprep.subr.mxu0 0.0
      %1221 = vmatpush2.msra.mxu0 %v1145
      %1222 = vmatprep.subr.mxu0 0.0
      %1223 = vmatpush2.msra.mxu0 %v1144
      %1224 = vmatprep.mubr.f32.mxu0 %v563
      %1225 = vmatmul.mubr.f32.gmra.mxu0 %v562
      %v1226 = vpop.f32.mrf.mxu0
      %v1227 = vadd.f32 0.0, %v1226
      %v1228 = vpop.f32.mrf.mxu0
      %1229 = vmatprep.mubr.f32.mxu0 %v565
      %1230 = vmatmul.mubr.f32.gmra.mxu0 %v564
      %v1231 = vpop.f32.mrf.mxu0
      %v1232 = vadd.f32 0.0, %v1231
      %v1233 = vpop.f32.mrf.mxu0
      %1234 = vmatprep.mubr.f32.mxu0 %v567
      %1235 = vmatmul.mubr.f32.gmra.mxu0 %v566
      %v1236 = vpop.f32.mrf.mxu0
      %v1237 = vadd.f32 0.0, %v1236
      %v1238 = vpop.f32.mrf.mxu0
      %1239 = vmatprep.mubr.f32.mxu0 %v569
      %1240 = vmatmul.mubr.f32.gmra.mxu0 %v568
      %v1241 = vpop.f32.mrf.mxu0
      %v1242 = vadd.f32 0.0, %v1241
      %v1243 = vpop.f32.mrf.mxu0
      %1244 = vmatprep.mubr.f32.mxu0 %v571
      %1245 = vmatmul.mubr.f32.gmra.mxu0 %v570
      %v1246 = vpop.f32.mrf.mxu0
      %v1247 = vadd.f32 0.0, %v1246
      %v1248 = vpop.f32.mrf.mxu0
      %1249 = vmatprep.mubr.f32.mxu0 %v573
      %1250 = vmatmul.mubr.f32.gmra.mxu0 %v572
      %v1251 = vpop.f32.mrf.mxu0
      %v1252 = vadd.f32 0.0, %v1251
      %v1253 = vpop.f32.mrf.mxu0
      %1254 = vmatprep.mubr.f32.mxu0 %v575
      %1255 = vmatmul.mubr.f32.gmra.mxu0 %v574
      %v1256 = vpop.f32.mrf.mxu0
      %v1257 = vadd.f32 0.0, %v1256
      %v1258 = vpop.f32.mrf.mxu0
      %1259 = vmatprep.mubr.f32.mxu0 %v577
      %1260 = vmatmul.mubr.f32.gmra.mxu0 %v576
      %v1261 = vpop.f32.mrf.mxu0
      %v1262 = vadd.f32 0.0, %v1261
      %v1263 = vpop.f32.mrf.mxu0
      %1264 = vmatprep.mubr.f32.mxu0 %v579
      %1265 = vmatmul.mubr.f32.gmra.mxu0 %v578
      %v1266 = vpop.f32.mrf.mxu0
      %v1267 = vadd.f32 0.0, %v1266
      %v1268 = vpop.f32.mrf.mxu0
      %1269 = vmatprep.mubr.f32.mxu0 %v581
      %1270 = vmatmul.mubr.f32.gmra.mxu0 %v580
      %v1271 = vpop.f32.mrf.mxu0
      %v1272 = vadd.f32 0.0, %v1271
      %v1273 = vpop.f32.mrf.mxu0
      %1274 = vmatprep.mubr.f32.mxu0 %v583
      %1275 = vmatmul.mubr.f32.gmra.mxu0 %v582
      %v1276 = vpop.f32.mrf.mxu0
      %v1277 = vadd.f32 0.0, %v1276
      %v1278 = vpop.f32.mrf.mxu0
      %1279 = vmatprep.mubr.f32.mxu0 %v585
      %1280 = vmatmul.mubr.f32.gmra.mxu0 %v584
      %v1281 = vpop.f32.mrf.mxu0
      %v1282 = vadd.f32 0.0, %v1281
      %v1283 = vpop.f32.mrf.mxu0
      %1284 = vmatprep.mubr.f32.mxu0 %v587
      %1285 = vmatmul.mubr.f32.gmra.mxu0 %v586
      %v1286 = vpop.f32.mrf.mxu0
      %v1287 = vadd.f32 0.0, %v1286
      %v1288 = vpop.f32.mrf.mxu0
      %1289 = vmatprep.mubr.f32.mxu0 %v589
      %1290 = vmatmul.mubr.f32.gmra.mxu0 %v588
      %v1291 = vpop.f32.mrf.mxu0
      %v1292 = vadd.f32 0.0, %v1291
      %v1293 = vpop.f32.mrf.mxu0
      %1294 = vmatprep.mubr.f32.mxu0 %v591
      %1295 = vmatmul.mubr.f32.gmra.mxu0 %v590
      %v1296 = vpop.f32.mrf.mxu0
      %v1297 = vadd.f32 0.0, %v1296
      %v1298 = vpop.f32.mrf.mxu0
      %1299 = vmatprep.mubr.f32.mxu0 %v593
      %1300 = vmatmul.mubr.f32.gmra.mxu0 %v592
      %v1301 = vpop.f32.mrf.mxu0
      %v1302 = vadd.f32 0.0, %v1301
      %v1303 = vpop.f32.mrf.mxu0
      %1304 = vdwg.mxu0
      %v1305 = vld [vmem:[%s2] sm:$0xff]
      %v1306 = vld [vmem:[%s2 + $0x8] sm:$0xff]
      %v1307 = vld [vmem:[%s2 + $0x10] sm:$0xff]
      %v1308 = vld [vmem:[%s2 + $0x18] sm:$0xff]
      %v1309 = vld [vmem:[%s2 + $0x20] sm:$0xff]
      %v1310 = vld [vmem:[%s2 + $0x28] sm:$0xff]
      %1311 = vmatprep.subr.mxu0 0.0
      %1312 = vmatpush1.msra.mxu0 0.0
      %1313 = vmatprep.subr.mxu0 0.0
      %1314 = vmatpush1.msra.mxu0 0.0
      %1315 = vmatprep.subr.mxu0 0.0
      %1316 = vmatpush1.msra.mxu0 0.0
      %1317 = vmatprep.subr.mxu0 0.0
      %1318 = vmatpush1.msra.mxu0 0.0
      %1319 = vmatprep.subr.mxu0 0.0
      %1320 = vmatpush1.msra.mxu0 0.0
      %1321 = vmatprep.subr.mxu0 0.0
      %1322 = vmatpush1.msra.mxu0 0.0
      %1323 = vmatprep.subr.mxu0 0.0
      %1324 = vmatpush1.msra.mxu0 0.0
      %1325 = vmatprep.subr.mxu0 0.0
      %1326 = vmatpush1.msra.mxu0 0.0
      %1327 = vmatprep.subr.mxu0 0.0
      %1328 = vmatpush1.msra.mxu0 0.0
      %1329 = vmatprep.subr.mxu0 0.0
      %1330 = vmatpush1.msra.mxu0 0.0
      %1331 = vmatprep.subr.mxu0 0.0
      %1332 = vmatpush1.msra.mxu0 %v1310
      %1333 = vmatprep.subr.mxu0 0.0
      %1334 = vmatpush1.msra.mxu0 %v1309
      %1335 = vmatprep.subr.mxu0 0.0
      %1336 = vmatpush1.msra.mxu0 %v1308
      %1337 = vmatprep.subr.mxu0 0.0
      %1338 = vmatpush1.msra.mxu0 %v1307
      %1339 = vmatprep.subr.mxu0 0.0
      %1340 = vmatpush1.msra.mxu0 %v1306
      %1341 = vmatprep.subr.mxu0 0.0
      %1342 = vmatpush1.msra.mxu0 %v1305
      %1343 = vmatprep.subr.mxu0 0.0
      %1344 = vmatpush2.msra.mxu0 0.0
      %1345 = vmatprep.subr.mxu0 0.0
      %1346 = vmatpush2.msra.mxu0 0.0
      %1347 = vmatprep.subr.mxu0 0.0
      %1348 = vmatpush2.msra.mxu0 0.0
      %1349 = vmatprep.subr.mxu0 0.0
      %1350 = vmatpush2.msra.mxu0 0.0
      %1351 = vmatprep.subr.mxu0 0.0
      %1352 = vmatpush2.msra.mxu0 0.0
      %1353 = vmatprep.subr.mxu0 0.0
      %1354 = vmatpush2.msra.mxu0 0.0
      %1355 = vmatprep.subr.mxu0 0.0
      %1356 = vmatpush2.msra.mxu0 0.0
      %1357 = vmatprep.subr.mxu0 0.0
      %1358 = vmatpush2.msra.mxu0 0.0
      %1359 = vmatprep.subr.mxu0 0.0
      %1360 = vmatpush2.msra.mxu0 0.0
      %1361 = vmatprep.subr.mxu0 0.0
      %1362 = vmatpush2.msra.mxu0 0.0
      %1363 = vmatprep.subr.mxu0 0.0
      %1364 = vmatpush2.msra.mxu0 0.0
      %1365 = vmatprep.subr.mxu0 0.0
      %1366 = vmatpush2.msra.mxu0 0.0
      %1367 = vmatprep.subr.mxu0 0.0
      %1368 = vmatpush2.msra.mxu0 0.0
      %1369 = vmatprep.subr.mxu0 0.0
      %1370 = vmatpush2.msra.mxu0 0.0
      %1371 = vmatprep.subr.mxu0 0.0
      %1372 = vmatpush2.msra.mxu0 0.0
      %1373 = vmatprep.subr.mxu0 0.0
      %1374 = vmatpush2.msra.mxu0 0.0
      %1375 = vmatprep.mubr.f32.mxu0 0.0
      %1376 = vmatmul.mubr.f32.gmra.mxu0 %v226
      %v1377 = vpop.f32.mrf.mxu0
      %v1378 = vadd.f32 0.0, %v1377
      %v1379 = vpop.f32.mrf.mxu0
      %1380 = vmatprep.mubr.f32.mxu0 0.0
      %1381 = vmatmul.mubr.f32.gmra.mxu0 %v229
      %v1382 = vpop.f32.mrf.mxu0
      %v1383 = vadd.f32 0.0, %v1382
      %v1384 = vpop.f32.mrf.mxu0
      %1385 = vmatprep.mubr.f32.mxu0 0.0
      %1386 = vmatmul.mubr.f32.gmra.mxu0 %v232
      %v1387 = vpop.f32.mrf.mxu0
      %v1388 = vadd.f32 0.0, %v1387
      %v1389 = vpop.f32.mrf.mxu0
      %1390 = vmatprep.mubr.f32.mxu0 0.0
      %1391 = vmatmul.mubr.f32.gmra.mxu0 %v235
      %v1392 = vpop.f32.mrf.mxu0
      %v1393 = vadd.f32 0.0, %v1392
      %v1394 = vpop.f32.mrf.mxu0
      %1395 = vmatprep.mubr.f32.mxu0 0.0
      %1396 = vmatmul.mubr.f32.gmra.mxu0 %v238
      %v1397 = vpop.f32.mrf.mxu0
      %v1398 = vadd.f32 0.0, %v1397
      %v1399 = vpop.f32.mrf.mxu0
      %1400 = vmatprep.mubr.f32.mxu0 0.0
      %1401 = vmatmul.mubr.f32.gmra.mxu0 %v241
      %v1402 = vpop.f32.mrf.mxu0
      %v1403 = vadd.f32 0.0, %v1402
      %v1404 = vpop.f32.mrf.mxu0
      %1405 = vmatprep.mubr.f32.mxu0 0.0
      %1406 = vmatmul.mubr.f32.gmra.mxu0 %v244
      %v1407 = vpop.f32.mrf.mxu0
      %v1408 = vadd.f32 0.0, %v1407
      %v1409 = vpop.f32.mrf.mxu0
      %1410 = vmatprep.mubr.f32.mxu0 0.0
      %1411 = vmatmul.mubr.f32.gmra.mxu0 %v247
      %v1412 = vpop.f32.mrf.mxu0
      %v1413 = vadd.f32 0.0, %v1412
      %v1414 = vpop.f32.mrf.mxu0
      %1415 = vmatprep.mubr.f32.mxu0 0.0
      %1416 = vmatmul.mubr.f32.gmra.mxu0 %v250
      %v1417 = vpop.f32.mrf.mxu0
      %v1418 = vadd.f32 0.0, %v1417
      %v1419 = vpop.f32.mrf.mxu0
      %1420 = vmatprep.mubr.f32.mxu0 0.0
      %1421 = vmatmul.mubr.f32.gmra.mxu0 %v253
      %v1422 = vpop.f32.mrf.mxu0
      %v1423 = vadd.f32 0.0, %v1422
      %v1424 = vpop.f32.mrf.mxu0
      %1425 = vmatprep.mubr.f32.mxu0 0.0
      %1426 = vmatmul.mubr.f32.gmra.mxu0 %v256
      %v1427 = vpop.f32.mrf.mxu0
      %v1428 = vadd.f32 0.0, %v1427
      %v1429 = vpop.f32.mrf.mxu0
      %1430 = vmatprep.mubr.f32.mxu0 0.0
      %1431 = vmatmul.mubr.f32.gmra.mxu0 %v259
      %v1432 = vpop.f32.mrf.mxu0
      %v1433 = vadd.f32 0.0, %v1432
      %v1434 = vpop.f32.mrf.mxu0
      %1435 = vmatprep.mubr.f32.mxu0 0.0
      %1436 = vmatmul.mubr.f32.gmra.mxu0 %v262
      %v1437 = vpop.f32.mrf.mxu0
      %v1438 = vadd.f32 0.0, %v1437
      %v1439 = vpop.f32.mrf.mxu0
      %1440 = vmatprep.mubr.f32.mxu0 0.0
      %1441 = vmatmul.mubr.f32.gmra.mxu0 %v265
      %v1442 = vpop.f32.mrf.mxu0
      %v1443 = vadd.f32 0.0, %v1442
      %v1444 = vpop.f32.mrf.mxu0
      %1445 = vmatprep.mubr.f32.mxu0 0.0
      %1446 = vmatmul.mubr.f32.gmra.mxu0 %v268
      %v1447 = vpop.f32.mrf.mxu0
      %v1448 = vadd.f32 0.0, %v1447
      %v1449 = vpop.f32.mrf.mxu0
      %1450 = vmatprep.mubr.f32.mxu0 0.0
      %1451 = vmatmul.mubr.f32.gmra.mxu0 %v271
      %v1452 = vpop.f32.mrf.mxu0
      %v1453 = vadd.f32 0.0, %v1452
      %v1454 = vpop.f32.mrf.mxu0
      %1455 = vdwg.mxu0
      %s1456 = scalar_lea.vmem %s2, 48
      %v1457 = vld [vmem:[%s1456] sm:$0xff]
      %v1458 = vld [vmem:[%s1456 + $0x8] sm:$0xff]
      %v1459 = vld [vmem:[%s1456 + $0x10] sm:$0xff]
      %v1460 = vld [vmem:[%s1456 + $0x18] sm:$0xff]
      %v1461 = vld [vmem:[%s1456 + $0x20] sm:$0xff]
      %v1462 = vld [vmem:[%s1456 + $0x28] sm:$0xff]
      %1463 = vmatprep.subr.mxu0 0.0
      %1464 = vmatpush1.msra.mxu0 0.0
      %1465 = vmatprep.subr.mxu0 0.0
      %1466 = vmatpush1.msra.mxu0 0.0
      %1467 = vmatprep.subr.mxu0 0.0
      %1468 = vmatpush1.msra.mxu0 0.0
      %1469 = vmatprep.subr.mxu0 0.0
      %1470 = vmatpush1.msra.mxu0 0.0
      %1471 = vmatprep.subr.mxu0 0.0
      %1472 = vmatpush1.msra.mxu0 0.0
      %1473 = vmatprep.subr.mxu0 0.0
      %1474 = vmatpush1.msra.mxu0 0.0
      %1475 = vmatprep.subr.mxu0 0.0
      %1476 = vmatpush1.msra.mxu0 0.0
      %1477 = vmatprep.subr.mxu0 0.0
      %1478 = vmatpush1.msra.mxu0 0.0
      %1479 = vmatprep.subr.mxu0 0.0
      %1480 = vmatpush1.msra.mxu0 0.0
      %1481 = vmatprep.subr.mxu0 0.0
      %1482 = vmatpush1.msra.mxu0 0.0
      %1483 = vmatprep.subr.mxu0 0.0
      %1484 = vmatpush1.msra.mxu0 %v1462
      %1485 = vmatprep.subr.mxu0 0.0
      %1486 = vmatpush1.msra.mxu0 %v1461
      %1487 = vmatprep.subr.mxu0 0.0
      %1488 = vmatpush1.msra.mxu0 %v1460
      %1489 = vmatprep.subr.mxu0 0.0
      %1490 = vmatpush1.msra.mxu0 %v1459
      %1491 = vmatprep.subr.mxu0 0.0
      %1492 = vmatpush1.msra.mxu0 %v1458
      %1493 = vmatprep.subr.mxu0 0.0
      %1494 = vmatpush1.msra.mxu0 %v1457
      %1495 = vmatprep.subr.mxu0 0.0
      %1496 = vmatpush2.msra.mxu0 0.0
      %1497 = vmatprep.subr.mxu0 0.0
      %1498 = vmatpush2.msra.mxu0 0.0
      %1499 = vmatprep.subr.mxu0 0.0
      %1500 = vmatpush2.msra.mxu0 0.0
      %1501 = vmatprep.subr.mxu0 0.0
      %1502 = vmatpush2.msra.mxu0 0.0
      %1503 = vmatprep.subr.mxu0 0.0
      %1504 = vmatpush2.msra.mxu0 0.0
      %1505 = vmatprep.subr.mxu0 0.0
      %1506 = vmatpush2.msra.mxu0 0.0
      %1507 = vmatprep.subr.mxu0 0.0
      %1508 = vmatpush2.msra.mxu0 0.0
      %1509 = vmatprep.subr.mxu0 0.0
      %1510 = vmatpush2.msra.mxu0 0.0
      %1511 = vmatprep.subr.mxu0 0.0
      %1512 = vmatpush2.msra.mxu0 0.0
      %1513 = vmatprep.subr.mxu0 0.0
      %1514 = vmatpush2.msra.mxu0 0.0
      %1515 = vmatprep.subr.mxu0 0.0
      %1516 = vmatpush2.msra.mxu0 0.0
      %1517 = vmatprep.subr.mxu0 0.0
      %1518 = vmatpush2.msra.mxu0 0.0
      %1519 = vmatprep.subr.mxu0 0.0
      %1520 = vmatpush2.msra.mxu0 0.0
      %1521 = vmatprep.subr.mxu0 0.0
      %1522 = vmatpush2.msra.mxu0 0.0
      %1523 = vmatprep.subr.mxu0 0.0
      %1524 = vmatpush2.msra.mxu0 0.0
      %1525 = vmatprep.subr.mxu0 0.0
      %1526 = vmatpush2.msra.mxu0 0.0
      %1527 = vmatprep.mubr.f32.mxu0 0.0
      %1528 = vmatmul.mubr.f32.gmra.mxu0 %v226
      %v1529 = vpop.f32.mrf.mxu0
      %v1530 = vadd.f32 0.0, %v1529
      %v1531 = vpop.f32.mrf.mxu0
      %1532 = vmatprep.mubr.f32.mxu0 0.0
      %1533 = vmatmul.mubr.f32.gmra.mxu0 %v229
      %v1534 = vpop.f32.mrf.mxu0
      %v1535 = vadd.f32 0.0, %v1534
      %v1536 = vpop.f32.mrf.mxu0
      %1537 = vmatprep.mubr.f32.mxu0 0.0
      %1538 = vmatmul.mubr.f32.gmra.mxu0 %v232
      %v1539 = vpop.f32.mrf.mxu0
      %v1540 = vadd.f32 0.0, %v1539
      %v1541 = vpop.f32.mrf.mxu0
      %1542 = vmatprep.mubr.f32.mxu0 0.0
      %1543 = vmatmul.mubr.f32.gmra.mxu0 %v235
      %v1544 = vpop.f32.mrf.mxu0
      %v1545 = vadd.f32 0.0, %v1544
      %v1546 = vpop.f32.mrf.mxu0
      %1547 = vmatprep.mubr.f32.mxu0 0.0
      %1548 = vmatmul.mubr.f32.gmra.mxu0 %v238
      %v1549 = vpop.f32.mrf.mxu0
      %v1550 = vadd.f32 0.0, %v1549
      %v1551 = vpop.f32.mrf.mxu0
      %1552 = vmatprep.mubr.f32.mxu0 0.0
      %1553 = vmatmul.mubr.f32.gmra.mxu0 %v241
      %v1554 = vpop.f32.mrf.mxu0
      %v1555 = vadd.f32 0.0, %v1554
      %v1556 = vpop.f32.mrf.mxu0
      %1557 = vmatprep.mubr.f32.mxu0 0.0
      %1558 = vmatmul.mubr.f32.gmra.mxu0 %v244
      %v1559 = vpop.f32.mrf.mxu0
      %v1560 = vadd.f32 0.0, %v1559
      %v1561 = vpop.f32.mrf.mxu0
      %1562 = vmatprep.mubr.f32.mxu0 0.0
      %1563 = vmatmul.mubr.f32.gmra.mxu0 %v247
      %v1564 = vpop.f32.mrf.mxu0
      %v1565 = vadd.f32 0.0, %v1564
      %v1566 = vpop.f32.mrf.mxu0
      %1567 = vmatprep.mubr.f32.mxu0 0.0
      %1568 = vmatmul.mubr.f32.gmra.mxu0 %v250
      %v1569 = vpop.f32.mrf.mxu0
      %v1570 = vadd.f32 0.0, %v1569
      %v1571 = vpop.f32.mrf.mxu0
      %1572 = vmatprep.mubr.f32.mxu0 0.0
      %1573 = vmatmul.mubr.f32.gmra.mxu0 %v253
      %v1574 = vpop.f32.mrf.mxu0
      %v1575 = vadd.f32 0.0, %v1574
      %v1576 = vpop.f32.mrf.mxu0
      %1577 = vmatprep.mubr.f32.mxu0 0.0
      %1578 = vmatmul.mubr.f32.gmra.mxu0 %v256
      %v1579 = vpop.f32.mrf.mxu0
      %v1580 = vadd.f32 0.0, %v1579
      %v1581 = vpop.f32.mrf.mxu0
      %1582 = vmatprep.mubr.f32.mxu0 0.0
      %1583 = vmatmul.mubr.f32.gmra.mxu0 %v259
      %v1584 = vpop.f32.mrf.mxu0
      %v1585 = vadd.f32 0.0, %v1584
      %v1586 = vpop.f32.mrf.mxu0
      %1587 = vmatprep.mubr.f32.mxu0 0.0
      %1588 = vmatmul.mubr.f32.gmra.mxu0 %v262
      %v1589 = vpop.f32.mrf.mxu0
      %v1590 = vadd.f32 0.0, %v1589
      %v1591 = vpop.f32.mrf.mxu0
      %1592 = vmatprep.mubr.f32.mxu0 0.0
      %1593 = vmatmul.mubr.f32.gmra.mxu0 %v265
      %v1594 = vpop.f32.mrf.mxu0
      %v1595 = vadd.f32 0.0, %v1594
      %v1596 = vpop.f32.mrf.mxu0
      %1597 = vmatprep.mubr.f32.mxu0 0.0
      %1598 = vmatmul.mubr.f32.gmra.mxu0 %v268
      %v1599 = vpop.f32.mrf.mxu0
      %v1600 = vadd.f32 0.0, %v1599
      %v1601 = vpop.f32.mrf.mxu0
      %1602 = vmatprep.mubr.f32.mxu0 0.0
      %1603 = vmatmul.mubr.f32.gmra.mxu0 %v271
      %v1604 = vpop.f32.mrf.mxu0
      %v1605 = vadd.f32 0.0, %v1604
      %v1606 = vpop.f32.mrf.mxu0
      %1607 = vdwg.mxu0
      %s1608 = scalar_lea.vmem %s2, 96
      %v1609 = vld [vmem:[%s1608] sm:$0xff]
      %v1610 = vld [vmem:[%s1608 + $0x8] sm:$0xff]
      %v1611 = vld [vmem:[%s1608 + $0x10] sm:$0xff]
      %v1612 = vld [vmem:[%s1608 + $0x18] sm:$0xff]
      %v1613 = vld [vmem:[%s1608 + $0x20] sm:$0xff]
      %v1614 = vld [vmem:[%s1608 + $0x28] sm:$0xff]
      %1615 = vmatprep.subr.mxu0 0.0
      %1616 = vmatpush1.msra.mxu0 0.0
      %1617 = vmatprep.subr.mxu0 0.0
      %1618 = vmatpush1.msra.mxu0 0.0
      %1619 = vmatprep.subr.mxu0 0.0
      %1620 = vmatpush1.msra.mxu0 0.0
      %1621 = vmatprep.subr.mxu0 0.0
      %1622 = vmatpush1.msra.mxu0 0.0
      %1623 = vmatprep.subr.mxu0 0.0
      %1624 = vmatpush1.msra.mxu0 0.0
      %1625 = vmatprep.subr.mxu0 0.0
      %1626 = vmatpush1.msra.mxu0 0.0
      %1627 = vmatprep.subr.mxu0 0.0
      %1628 = vmatpush1.msra.mxu0 0.0
      %1629 = vmatprep.subr.mxu0 0.0
      %1630 = vmatpush1.msra.mxu0 0.0
      %1631 = vmatprep.subr.mxu0 0.0
      %1632 = vmatpush1.msra.mxu0 0.0
      %1633 = vmatprep.subr.mxu0 0.0
      %1634 = vmatpush1.msra.mxu0 0.0
      %1635 = vmatprep.subr.mxu0 0.0
      %1636 = vmatpush1.msra.mxu0 %v1614
      %1637 = vmatprep.subr.mxu0 0.0
      %1638 = vmatpush1.msra.mxu0 %v1613
      %1639 = vmatprep.subr.mxu0 0.0
      %1640 = vmatpush1.msra.mxu0 %v1612
      %1641 = vmatprep.subr.mxu0 0.0
      %1642 = vmatpush1.msra.mxu0 %v1611
      %1643 = vmatprep.subr.mxu0 0.0
      %1644 = vmatpush1.msra.mxu0 %v1610
      %1645 = vmatprep.subr.mxu0 0.0
      %1646 = vmatpush1.msra.mxu0 %v1609
      %1647 = vmatprep.subr.mxu0 0.0
      %1648 = vmatpush2.msra.mxu0 0.0
      %1649 = vmatprep.subr.mxu0 0.0
      %1650 = vmatpush2.msra.mxu0 0.0
      %1651 = vmatprep.subr.mxu0 0.0
      %1652 = vmatpush2.msra.mxu0 0.0
      %1653 = vmatprep.subr.mxu0 0.0
      %1654 = vmatpush2.msra.mxu0 0.0
      %1655 = vmatprep.subr.mxu0 0.0
      %1656 = vmatpush2.msra.mxu0 0.0
      %1657 = vmatprep.subr.mxu0 0.0
      %1658 = vmatpush2.msra.mxu0 0.0
      %1659 = vmatprep.subr.mxu0 0.0
      %1660 = vmatpush2.msra.mxu0 0.0
      %1661 = vmatprep.subr.mxu0 0.0
      %1662 = vmatpush2.msra.mxu0 0.0
      %1663 = vmatprep.subr.mxu0 0.0
      %1664 = vmatpush2.msra.mxu0 0.0
      %1665 = vmatprep.subr.mxu0 0.0
      %1666 = vmatpush2.msra.mxu0 0.0
      %1667 = vmatprep.subr.mxu0 0.0
      %1668 = vmatpush2.msra.mxu0 0.0
      %1669 = vmatprep.subr.mxu0 0.0
      %1670 = vmatpush2.msra.mxu0 0.0
      %1671 = vmatprep.subr.mxu0 0.0
      %1672 = vmatpush2.msra.mxu0 0.0
      %1673 = vmatprep.subr.mxu0 0.0
      %1674 = vmatpush2.msra.mxu0 0.0
      %1675 = vmatprep.subr.mxu0 0.0
      %1676 = vmatpush2.msra.mxu0 0.0
      %1677 = vmatprep.subr.mxu0 0.0
      %1678 = vmatpush2.msra.mxu0 0.0
      %1679 = vmatprep.mubr.f32.mxu0 0.0
      %1680 = vmatmul.mubr.f32.gmra.mxu0 %v226
      %v1681 = vpop.f32.mrf.mxu0
      %v1682 = vadd.f32 0.0, %v1681
      %v1683 = vpop.f32.mrf.mxu0
      %1684 = vmatprep.mubr.f32.mxu0 0.0
      %1685 = vmatmul.mubr.f32.gmra.mxu0 %v229
      %v1686 = vpop.f32.mrf.mxu0
      %v1687 = vadd.f32 0.0, %v1686
      %v1688 = vpop.f32.mrf.mxu0
      %1689 = vmatprep.mubr.f32.mxu0 0.0
      %1690 = vmatmul.mubr.f32.gmra.mxu0 %v232
      %v1691 = vpop.f32.mrf.mxu0
      %v1692 = vadd.f32 0.0, %v1691
      %v1693 = vpop.f32.mrf.mxu0
      %1694 = vmatprep.mubr.f32.mxu0 0.0
      %1695 = vmatmul.mubr.f32.gmra.mxu0 %v235
      %v1696 = vpop.f32.mrf.mxu0
      %v1697 = vadd.f32 0.0, %v1696
      %v1698 = vpop.f32.mrf.mxu0
      %1699 = vmatprep.mubr.f32.mxu0 0.0
      %1700 = vmatmul.mubr.f32.gmra.mxu0 %v238
      %v1701 = vpop.f32.mrf.mxu0
      %v1702 = vadd.f32 0.0, %v1701
      %v1703 = vpop.f32.mrf.mxu0
      %1704 = vmatprep.mubr.f32.mxu0 0.0
      %1705 = vmatmul.mubr.f32.gmra.mxu0 %v241
      %v1706 = vpop.f32.mrf.mxu0
      %v1707 = vadd.f32 0.0, %v1706
      %v1708 = vpop.f32.mrf.mxu0
      %1709 = vmatprep.mubr.f32.mxu0 0.0
      %1710 = vmatmul.mubr.f32.gmra.mxu0 %v244
      %v1711 = vpop.f32.mrf.mxu0
      %v1712 = vadd.f32 0.0, %v1711
      %v1713 = vpop.f32.mrf.mxu0
      %1714 = vmatprep.mubr.f32.mxu0 0.0
      %1715 = vmatmul.mubr.f32.gmra.mxu0 %v247
      %v1716 = vpop.f32.mrf.mxu0
      %v1717 = vadd.f32 0.0, %v1716
      %v1718 = vpop.f32.mrf.mxu0
      %1719 = vmatprep.mubr.f32.mxu0 0.0
      %1720 = vmatmul.mubr.f32.gmra.mxu0 %v250
      %v1721 = vpop.f32.mrf.mxu0
      %v1722 = vadd.f32 0.0, %v1721
      %v1723 = vpop.f32.mrf.mxu0
      %1724 = vmatprep.mubr.f32.mxu0 0.0
      %1725 = vmatmul.mubr.f32.gmra.mxu0 %v253
      %v1726 = vpop.f32.mrf.mxu0
      %v1727 = vadd.f32 0.0, %v1726
      %v1728 = vpop.f32.mrf.mxu0
      %1729 = vmatprep.mubr.f32.mxu0 0.0
      %1730 = vmatmul.mubr.f32.gmra.mxu0 %v256
      %v1731 = vpop.f32.mrf.mxu0
      %v1732 = vadd.f32 0.0, %v1731
      %v1733 = vpop.f32.mrf.mxu0
      %1734 = vmatprep.mubr.f32.mxu0 0.0
      %1735 = vmatmul.mubr.f32.gmra.mxu0 %v259
      %v1736 = vpop.f32.mrf.mxu0
      %v1737 = vadd.f32 0.0, %v1736
      %v1738 = vpop.f32.mrf.mxu0
      %1739 = vmatprep.mubr.f32.mxu0 0.0
      %1740 = vmatmul.mubr.f32.gmra.mxu0 %v262
      %v1741 = vpop.f32.mrf.mxu0
      %v1742 = vadd.f32 0.0, %v1741
      %v1743 = vpop.f32.mrf.mxu0
      %1744 = vmatprep.mubr.f32.mxu0 0.0
      %1745 = vmatmul.mubr.f32.gmra.mxu0 %v265
      %v1746 = vpop.f32.mrf.mxu0
      %v1747 = vadd.f32 0.0, %v1746
      %v1748 = vpop.f32.mrf.mxu0
      %1749 = vmatprep.mubr.f32.mxu0 0.0
      %1750 = vmatmul.mubr.f32.gmra.mxu0 %v268
      %v1751 = vpop.f32.mrf.mxu0
      %v1752 = vadd.f32 0.0, %v1751
      %v1753 = vpop.f32.mrf.mxu0
      %1754 = vmatprep.mubr.f32.mxu0 0.0
      %1755 = vmatmul.mubr.f32.gmra.mxu0 %v271
      %v1756 = vpop.f32.mrf.mxu0
      %v1757 = vadd.f32 0.0, %v1756
      %v1758 = vpop.f32.mrf.mxu0
      %1759 = vdwg.mxu0
      %s1760 = scalar_lea.vmem %s2, 144
      %v1761 = vld [vmem:[%s1760] sm:$0xff]
      %v1762 = vld [vmem:[%s1760 + $0x8] sm:$0xff]
      %v1763 = vld [vmem:[%s1760 + $0x10] sm:$0xff]
      %v1764 = vld [vmem:[%s1760 + $0x18] sm:$0xff]
      %v1765 = vld [vmem:[%s1760 + $0x20] sm:$0xff]
      %v1766 = vld [vmem:[%s1760 + $0x28] sm:$0xff]
      %1767 = vmatprep.subr.mxu0 0.0
      %1768 = vmatpush1.msra.mxu0 0.0
      %1769 = vmatprep.subr.mxu0 0.0
      %1770 = vmatpush1.msra.mxu0 0.0
      %1771 = vmatprep.subr.mxu0 0.0
      %1772 = vmatpush1.msra.mxu0 0.0
      %1773 = vmatprep.subr.mxu0 0.0
      %1774 = vmatpush1.msra.mxu0 0.0
      %1775 = vmatprep.subr.mxu0 0.0
      %1776 = vmatpush1.msra.mxu0 0.0
      %1777 = vmatprep.subr.mxu0 0.0
      %1778 = vmatpush1.msra.mxu0 0.0
      %1779 = vmatprep.subr.mxu0 0.0
      %1780 = vmatpush1.msra.mxu0 0.0
      %1781 = vmatprep.subr.mxu0 0.0
      %1782 = vmatpush1.msra.mxu0 0.0
      %1783 = vmatprep.subr.mxu0 0.0
      %1784 = vmatpush1.msra.mxu0 0.0
      %1785 = vmatprep.subr.mxu0 0.0
      %1786 = vmatpush1.msra.mxu0 0.0
      %1787 = vmatprep.subr.mxu0 0.0
      %1788 = vmatpush1.msra.mxu0 %v1766
      %1789 = vmatprep.subr.mxu0 0.0
      %1790 = vmatpush1.msra.mxu0 %v1765
      %1791 = vmatprep.subr.mxu0 0.0
      %1792 = vmatpush1.msra.mxu0 %v1764
      %1793 = vmatprep.subr.mxu0 0.0
      %1794 = vmatpush1.msra.mxu0 %v1763
      %1795 = vmatprep.subr.mxu0 0.0
      %1796 = vmatpush1.msra.mxu0 %v1762
      %1797 = vmatprep.subr.mxu0 0.0
      %1798 = vmatpush1.msra.mxu0 %v1761
      %1799 = vmatprep.subr.mxu0 0.0
      %1800 = vmatpush2.msra.mxu0 0.0
      %1801 = vmatprep.subr.mxu0 0.0
      %1802 = vmatpush2.msra.mxu0 0.0
      %1803 = vmatprep.subr.mxu0 0.0
      %1804 = vmatpush2.msra.mxu0 0.0
      %1805 = vmatprep.subr.mxu0 0.0
      %1806 = vmatpush2.msra.mxu0 0.0
      %1807 = vmatprep.subr.mxu0 0.0
      %1808 = vmatpush2.msra.mxu0 0.0
      %1809 = vmatprep.subr.mxu0 0.0
      %1810 = vmatpush2.msra.mxu0 0.0
      %1811 = vmatprep.subr.mxu0 0.0
      %1812 = vmatpush2.msra.mxu0 0.0
      %1813 = vmatprep.subr.mxu0 0.0
      %1814 = vmatpush2.msra.mxu0 0.0
      %1815 = vmatprep.subr.mxu0 0.0
      %1816 = vmatpush2.msra.mxu0 0.0
      %1817 = vmatprep.subr.mxu0 0.0
      %1818 = vmatpush2.msra.mxu0 0.0
      %1819 = vmatprep.subr.mxu0 0.0
      %1820 = vmatpush2.msra.mxu0 0.0
      %1821 = vmatprep.subr.mxu0 0.0
      %1822 = vmatpush2.msra.mxu0 0.0
      %1823 = vmatprep.subr.mxu0 0.0
      %1824 = vmatpush2.msra.mxu0 0.0
      %1825 = vmatprep.subr.mxu0 0.0
      %1826 = vmatpush2.msra.mxu0 0.0
      %1827 = vmatprep.subr.mxu0 0.0
      %1828 = vmatpush2.msra.mxu0 0.0
      %1829 = vmatprep.subr.mxu0 0.0
      %1830 = vmatpush2.msra.mxu0 0.0
      %1831 = vmatprep.mubr.f32.mxu0 0.0
      %1832 = vmatmul.mubr.f32.gmra.mxu0 %v226
      %v1833 = vpop.f32.mrf.mxu0
      %v1834 = vadd.f32 0.0, %v1833
      %v1835 = vpop.f32.mrf.mxu0
      %1836 = vmatprep.mubr.f32.mxu0 0.0
      %1837 = vmatmul.mubr.f32.gmra.mxu0 %v229
      %v1838 = vpop.f32.mrf.mxu0
      %v1839 = vadd.f32 0.0, %v1838
      %v1840 = vpop.f32.mrf.mxu0
      %1841 = vmatprep.mubr.f32.mxu0 0.0
      %1842 = vmatmul.mubr.f32.gmra.mxu0 %v232
      %v1843 = vpop.f32.mrf.mxu0
      %v1844 = vadd.f32 0.0, %v1843
      %v1845 = vpop.f32.mrf.mxu0
      %1846 = vmatprep.mubr.f32.mxu0 0.0
      %1847 = vmatmul.mubr.f32.gmra.mxu0 %v235
      %v1848 = vpop.f32.mrf.mxu0
      %v1849 = vadd.f32 0.0, %v1848
      %v1850 = vpop.f32.mrf.mxu0
      %1851 = vmatprep.mubr.f32.mxu0 0.0
      %1852 = vmatmul.mubr.f32.gmra.mxu0 %v238
      %v1853 = vpop.f32.mrf.mxu0
      %v1854 = vadd.f32 0.0, %v1853
      %v1855 = vpop.f32.mrf.mxu0
      %1856 = vmatprep.mubr.f32.mxu0 0.0
      %1857 = vmatmul.mubr.f32.gmra.mxu0 %v241
      %v1858 = vpop.f32.mrf.mxu0
      %v1859 = vadd.f32 0.0, %v1858
      %v1860 = vpop.f32.mrf.mxu0
      %1861 = vmatprep.mubr.f32.mxu0 0.0
      %1862 = vmatmul.mubr.f32.gmra.mxu0 %v244
      %v1863 = vpop.f32.mrf.mxu0
      %v1864 = vadd.f32 0.0, %v1863
      %v1865 = vpop.f32.mrf.mxu0
      %1866 = vmatprep.mubr.f32.mxu0 0.0
      %1867 = vmatmul.mubr.f32.gmra.mxu0 %v247
      %v1868 = vpop.f32.mrf.mxu0
      %v1869 = vadd.f32 0.0, %v1868
      %v1870 = vpop.f32.mrf.mxu0
      %1871 = vmatprep.mubr.f32.mxu0 0.0
      %1872 = vmatmul.mubr.f32.gmra.mxu0 %v250
      %v1873 = vpop.f32.mrf.mxu0
      %v1874 = vadd.f32 0.0, %v1873
      %v1875 = vpop.f32.mrf.mxu0
      %1876 = vmatprep.mubr.f32.mxu0 0.0
      %1877 = vmatmul.mubr.f32.gmra.mxu0 %v253
      %v1878 = vpop.f32.mrf.mxu0
      %v1879 = vadd.f32 0.0, %v1878
      %v1880 = vpop.f32.mrf.mxu0
      %1881 = vmatprep.mubr.f32.mxu0 0.0
      %1882 = vmatmul.mubr.f32.gmra.mxu0 %v256
      %v1883 = vpop.f32.mrf.mxu0
      %v1884 = vadd.f32 0.0, %v1883
      %v1885 = vpop.f32.mrf.mxu0
      %1886 = vmatprep.mubr.f32.mxu0 0.0
      %1887 = vmatmul.mubr.f32.gmra.mxu0 %v259
      %v1888 = vpop.f32.mrf.mxu0
      %v1889 = vadd.f32 0.0, %v1888
      %v1890 = vpop.f32.mrf.mxu0
      %1891 = vmatprep.mubr.f32.mxu0 0.0
      %1892 = vmatmul.mubr.f32.gmra.mxu0 %v262
      %v1893 = vpop.f32.mrf.mxu0
      %v1894 = vadd.f32 0.0, %v1893
      %v1895 = vpop.f32.mrf.mxu0
      %1896 = vmatprep.mubr.f32.mxu0 0.0
      %1897 = vmatmul.mubr.f32.gmra.mxu0 %v265
      %v1898 = vpop.f32.mrf.mxu0
      %v1899 = vadd.f32 0.0, %v1898
      %v1900 = vpop.f32.mrf.mxu0
      %1901 = vmatprep.mubr.f32.mxu0 0.0
      %1902 = vmatmul.mubr.f32.gmra.mxu0 %v268
      %v1903 = vpop.f32.mrf.mxu0
      %v1904 = vadd.f32 0.0, %v1903
      %v1905 = vpop.f32.mrf.mxu0
      %1906 = vmatprep.mubr.f32.mxu0 0.0
      %1907 = vmatmul.mubr.f32.gmra.mxu0 %v271
      %v1908 = vpop.f32.mrf.mxu0
      %v1909 = vadd.f32 0.0, %v1908
      %v1910 = vpop.f32.mrf.mxu0
      %1911 = vdwg.mxu0
      %v1912 = vmul.f32 %v1378, %v1378
      %v1913 = vmul.f32 %v1383, %v1383
      %v1914 = vmul.f32 %v1388, %v1388
      %v1915 = vmul.f32 %v1393, %v1393
      %v1916 = vmul.f32 %v1398, %v1398
      %v1917 = vmul.f32 %v1403, %v1403
      %v1918 = vmul.f32 %v1408, %v1408
      %v1919 = vmul.f32 %v1413, %v1413
      %v1920 = vmul.f32 %v1418, %v1418
      %v1921 = vmul.f32 %v1423, %v1423
      %v1922 = vmul.f32 %v1428, %v1428
      %v1923 = vmul.f32 %v1433, %v1433
      %v1924 = vmul.f32 %v1438, %v1438
      %v1925 = vmul.f32 %v1443, %v1443
      %v1926 = vmul.f32 %v1448, %v1448
      %v1927 = vmul.f32 %v1453, %v1453
      %v1928 = vmul.f32 %v1530, %v1530
      %v1929 = vmul.f32 %v1535, %v1535
      %v1930 = vmul.f32 %v1540, %v1540
      %v1931 = vmul.f32 %v1545, %v1545
      %v1932 = vmul.f32 %v1550, %v1550
      %v1933 = vmul.f32 %v1555, %v1555
      %v1934 = vmul.f32 %v1560, %v1560
      %v1935 = vmul.f32 %v1565, %v1565
      %v1936 = vmul.f32 %v1570, %v1570
      %v1937 = vmul.f32 %v1575, %v1575
      %v1938 = vmul.f32 %v1580, %v1580
      %v1939 = vmul.f32 %v1585, %v1585
      %v1940 = vmul.f32 %v1590, %v1590
      %v1941 = vmul.f32 %v1595, %v1595
      %v1942 = vmul.f32 %v1600, %v1600
      %v1943 = vmul.f32 %v1605, %v1605
      %v1944 = vadd.f32 %v1912, %v1928
      %v1945 = vadd.f32 %v1913, %v1929
      %v1946 = vadd.f32 %v1914, %v1930
      %v1947 = vadd.f32 %v1915, %v1931
      %v1948 = vadd.f32 %v1916, %v1932
      %v1949 = vadd.f32 %v1917, %v1933
      %v1950 = vadd.f32 %v1918, %v1934
      %v1951 = vadd.f32 %v1919, %v1935
      %v1952 = vadd.f32 %v1920, %v1936
      %v1953 = vadd.f32 %v1921, %v1937
      %v1954 = vadd.f32 %v1922, %v1938
      %v1955 = vadd.f32 %v1923, %v1939
      %v1956 = vadd.f32 %v1924, %v1940
      %v1957 = vadd.f32 %v1925, %v1941
      %v1958 = vadd.f32 %v1926, %v1942
      %v1959 = vadd.f32 %v1927, %v1943
      %v1960 = vmul.f32 %v1378, %v1682
      %v1961 = vmul.f32 %v1383, %v1687
      %v1962 = vmul.f32 %v1388, %v1692
      %v1963 = vmul.f32 %v1393, %v1697
      %v1964 = vmul.f32 %v1398, %v1702
      %v1965 = vmul.f32 %v1403, %v1707
      %v1966 = vmul.f32 %v1408, %v1712
      %v1967 = vmul.f32 %v1413, %v1717
      %v1968 = vmul.f32 %v1418, %v1722
      %v1969 = vmul.f32 %v1423, %v1727
      %v1970 = vmul.f32 %v1428, %v1732
      %v1971 = vmul.f32 %v1433, %v1737
      %v1972 = vmul.f32 %v1438, %v1742
      %v1973 = vmul.f32 %v1443, %v1747
      %v1974 = vmul.f32 %v1448, %v1752
      %v1975 = vmul.f32 %v1453, %v1757
      %v1976 = vmul.f32 %v1530, %v1834
      %v1977 = vmul.f32 %v1535, %v1839
      %v1978 = vmul.f32 %v1540, %v1844
      %v1979 = vmul.f32 %v1545, %v1849
      %v1980 = vmul.f32 %v1550, %v1854
      %v1981 = vmul.f32 %v1555, %v1859
      %v1982 = vmul.f32 %v1560, %v1864
      %v1983 = vmul.f32 %v1565, %v1869
      %v1984 = vmul.f32 %v1570, %v1874
      %v1985 = vmul.f32 %v1575, %v1879
      %v1986 = vmul.f32 %v1580, %v1884
      %v1987 = vmul.f32 %v1585, %v1889
      %v1988 = vmul.f32 %v1590, %v1894
      %v1989 = vmul.f32 %v1595, %v1899
      %v1990 = vmul.f32 %v1600, %v1904
      %v1991 = vmul.f32 %v1605, %v1909
      %v1992 = vadd.f32 %v1960, %v1976
      %v1993 = vadd.f32 %v1961, %v1977
      %v1994 = vadd.f32 %v1962, %v1978
      %v1995 = vadd.f32 %v1963, %v1979
      %v1996 = vadd.f32 %v1964, %v1980
      %v1997 = vadd.f32 %v1965, %v1981
      %v1998 = vadd.f32 %v1966, %v1982
      %v1999 = vadd.f32 %v1967, %v1983
      %v2000 = vadd.f32 %v1968, %v1984
      %v2001 = vadd.f32 %v1969, %v1985
      %v2002 = vadd.f32 %v1970, %v1986
      %v2003 = vadd.f32 %v1971, %v1987
      %v2004 = vadd.f32 %v1972, %v1988
      %v2005 = vadd.f32 %v1973, %v1989
      %v2006 = vadd.f32 %v1974, %v1990
      %v2007 = vadd.f32 %v1975, %v1991
      %v2008 = vmul.f32 %v1682, %v1682
      %v2009 = vmul.f32 %v1687, %v1687
      %v2010 = vmul.f32 %v1692, %v1692
      %v2011 = vmul.f32 %v1697, %v1697
      %v2012 = vmul.f32 %v1702, %v1702
      %v2013 = vmul.f32 %v1707, %v1707
      %v2014 = vmul.f32 %v1712, %v1712
      %v2015 = vmul.f32 %v1717, %v1717
      %v2016 = vmul.f32 %v1722, %v1722
      %v2017 = vmul.f32 %v1727, %v1727
      %v2018 = vmul.f32 %v1732, %v1732
      %v2019 = vmul.f32 %v1737, %v1737
      %v2020 = vmul.f32 %v1742, %v1742
      %v2021 = vmul.f32 %v1747, %v1747
      %v2022 = vmul.f32 %v1752, %v1752
      %v2023 = vmul.f32 %v1757, %v1757
      %v2024 = vmul.f32 %v1834, %v1834
      %v2025 = vmul.f32 %v1839, %v1839
      %v2026 = vmul.f32 %v1844, %v1844
      %v2027 = vmul.f32 %v1849, %v1849
      %v2028 = vmul.f32 %v1854, %v1854
      %v2029 = vmul.f32 %v1859, %v1859
      %v2030 = vmul.f32 %v1864, %v1864
      %v2031 = vmul.f32 %v1869, %v1869
      %v2032 = vmul.f32 %v1874, %v1874
      %v2033 = vmul.f32 %v1879, %v1879
      %v2034 = vmul.f32 %v1884, %v1884
      %v2035 = vmul.f32 %v1889, %v1889
      %v2036 = vmul.f32 %v1894, %v1894
      %v2037 = vmul.f32 %v1899, %v1899
      %v2038 = vmul.f32 %v1904, %v1904
      %v2039 = vmul.f32 %v1909, %v1909
      %v2040 = vadd.f32 %v2008, %v2024
      %v2041 = vadd.f32 %v2009, %v2025
      %v2042 = vadd.f32 %v2010, %v2026
      %v2043 = vadd.f32 %v2011, %v2027
      %v2044 = vadd.f32 %v2012, %v2028
      %v2045 = vadd.f32 %v2013, %v2029
      %v2046 = vadd.f32 %v2014, %v2030
      %v2047 = vadd.f32 %v2015, %v2031
      %v2048 = vadd.f32 %v2016, %v2032
      %v2049 = vadd.f32 %v2017, %v2033
      %v2050 = vadd.f32 %v2018, %v2034
      %v2051 = vadd.f32 %v2019, %v2035
      %v2052 = vadd.f32 %v2020, %v2036
      %v2053 = vadd.f32 %v2021, %v2037
      %v2054 = vadd.f32 %v2022, %v2038
      %v2055 = vadd.f32 %v2023, %v2039
      %v2056 = vmul.f32 %v693, %v1944
      %v2057 = vmul.f32 %v698, %v1945
      %v2058 = vmul.f32 %v703, %v1946
      %v2059 = vmul.f32 %v708, %v1947
      %v2060 = vmul.f32 %v713, %v1948
      %v2061 = vmul.f32 %v718, %v1949
      %v2062 = vmul.f32 %v723, %v1950
      %v2063 = vmul.f32 %v728, %v1951
      %v2064 = vmul.f32 %v733, %v1952
      %v2065 = vmul.f32 %v738, %v1953
      %v2066 = vmul.f32 %v743, %v1954
      %v2067 = vmul.f32 %v748, %v1955
      %v2068 = vmul.f32 %v753, %v1956
      %v2069 = vmul.f32 %v758, %v1957
      %v2070 = vmul.f32 %v763, %v1958
      %v2071 = vmul.f32 %v768, %v1959
      %v2072 = vmul.f32 %v871, %v1992
      %v2073 = vmul.f32 %v876, %v1993
      %v2074 = vmul.f32 %v881, %v1994
      %v2075 = vmul.f32 %v886, %v1995
      %v2076 = vmul.f32 %v891, %v1996
      %v2077 = vmul.f32 %v896, %v1997
      %v2078 = vmul.f32 %v901, %v1998
      %v2079 = vmul.f32 %v906, %v1999
      %v2080 = vmul.f32 %v911, %v2000
      %v2081 = vmul.f32 %v916, %v2001
      %v2082 = vmul.f32 %v921, %v2002
      %v2083 = vmul.f32 %v926, %v2003
      %v2084 = vmul.f32 %v931, %v2004
      %v2085 = vmul.f32 %v936, %v2005
      %v2086 = vmul.f32 %v941, %v2006
      %v2087 = vmul.f32 %v946, %v2007
      %v2088 = vadd.f32 %v2056, %v2072
      %v2089 = vadd.f32 %v2057, %v2073
      %v2090 = vadd.f32 %v2058, %v2074
      %v2091 = vadd.f32 %v2059, %v2075
      %v2092 = vadd.f32 %v2060, %v2076
      %v2093 = vadd.f32 %v2061, %v2077
      %v2094 = vadd.f32 %v2062, %v2078
      %v2095 = vadd.f32 %v2063, %v2079
      %v2096 = vadd.f32 %v2064, %v2080
      %v2097 = vadd.f32 %v2065, %v2081
      %v2098 = vadd.f32 %v2066, %v2082
      %v2099 = vadd.f32 %v2067, %v2083
      %v2100 = vadd.f32 %v2068, %v2084
      %v2101 = vadd.f32 %v2069, %v2085
      %v2102 = vadd.f32 %v2070, %v2086
      %v2103 = vadd.f32 %v2071, %v2087
      %v2104 = vmul.f32 %v1049, %v2040
      %v2105 = vmul.f32 %v1054, %v2041
      %v2106 = vmul.f32 %v1059, %v2042
      %v2107 = vmul.f32 %v1064, %v2043
      %v2108 = vmul.f32 %v1069, %v2044
      %v2109 = vmul.f32 %v1074, %v2045
      %v2110 = vmul.f32 %v1079, %v2046
      %v2111 = vmul.f32 %v1084, %v2047
      %v2112 = vmul.f32 %v1089, %v2048
      %v2113 = vmul.f32 %v1094, %v2049
      %v2114 = vmul.f32 %v1099, %v2050
      %v2115 = vmul.f32 %v1104, %v2051
      %v2116 = vmul.f32 %v1109, %v2052
      %v2117 = vmul.f32 %v1114, %v2053
      %v2118 = vmul.f32 %v1119, %v2054
      %v2119 = vmul.f32 %v1124, %v2055
      %v2120 = vadd.f32 %v2088, %v2104
      %v2121 = vadd.f32 %v2089, %v2105
      %v2122 = vadd.f32 %v2090, %v2106
      %v2123 = vadd.f32 %v2091, %v2107
      %v2124 = vadd.f32 %v2092, %v2108
      %v2125 = vadd.f32 %v2093, %v2109
      %v2126 = vadd.f32 %v2094, %v2110
      %v2127 = vadd.f32 %v2095, %v2111
      %v2128 = vadd.f32 %v2096, %v2112
      %v2129 = vadd.f32 %v2097, %v2113
      %v2130 = vadd.f32 %v2098, %v2114
      %v2131 = vadd.f32 %v2099, %v2115
      %v2132 = vadd.f32 %v2100, %v2116
      %v2133 = vadd.f32 %v2101, %v2117
      %v2134 = vadd.f32 %v2102, %v2118
      %v2135 = vadd.f32 %v2103, %v2119
      %v2136 = vadd.f32 %v2120, %v1227
      %v2137 = vadd.f32 %v2121, %v1232
      %v2138 = vadd.f32 %v2122, %v1237
      %v2139 = vadd.f32 %v2123, %v1242
      %v2140 = vadd.f32 %v2124, %v1247
      %v2141 = vadd.f32 %v2125, %v1252
      %v2142 = vadd.f32 %v2126, %v1257
      %v2143 = vadd.f32 %v2127, %v1262
      %v2144 = vadd.f32 %v2128, %v1267
      %v2145 = vadd.f32 %v2129, %v1272
      %v2146 = vadd.f32 %v2130, %v1277
      %v2147 = vadd.f32 %v2131, %v1282
      %v2148 = vadd.f32 %v2132, %v1287
      %v2149 = vadd.f32 %v2133, %v1292
      %v2150 = vadd.f32 %v2134, %v1297
      %v2151 = vadd.f32 %v2135, %v1302
      %vm2152 = vcmask 64512
      %v2153 = vsel %vm2152, %v2136, 0.0
      %2154 = vadd.xlane.f32.xlu0 %v2153
      %v2155 = vpop.xlane.xlu0 %2154
      %v2156 = vsel %vm2152, %v2137, 0.0
      %2157 = vadd.xlane.f32.xlu0 %v2156
      %v2158 = vpop.xlane.xlu0 %2157
      %v2159 = vsel %vm2152, %v2138, 0.0
      %2160 = vadd.xlane.f32.xlu0 %v2159
      %v2161 = vpop.xlane.xlu0 %2160
      %v2162 = vsel %vm2152, %v2139, 0.0
      %2163 = vadd.xlane.f32.xlu0 %v2162
      %v2164 = vpop.xlane.xlu0 %2163
      %v2165 = vsel %vm2152, %v2140, 0.0
      %2166 = vadd.xlane.f32.xlu0 %v2165
      %v2167 = vpop.xlane.xlu0 %2166
      %v2168 = vsel %vm2152, %v2141, 0.0
      %2169 = vadd.xlane.f32.xlu0 %v2168
      %v2170 = vpop.xlane.xlu0 %2169
      %v2171 = vsel %vm2152, %v2142, 0.0
      %2172 = vadd.xlane.f32.xlu0 %v2171
      %v2173 = vpop.xlane.xlu0 %2172
      %v2174 = vsel %vm2152, %v2143, 0.0
      %2175 = vadd.xlane.f32.xlu0 %v2174
      %v2176 = vpop.xlane.xlu0 %2175
      %v2177 = vsel %vm2152, %v2144, 0.0
      %2178 = vadd.xlane.f32.xlu0 %v2177
      %v2179 = vpop.xlane.xlu0 %2178
      %v2180 = vsel %vm2152, %v2145, 0.0
      %2181 = vadd.xlane.f32.xlu0 %v2180
      %v2182 = vpop.xlane.xlu0 %2181
      %v2183 = vsel %vm2152, %v2146, 0.0
      %2184 = vadd.xlane.f32.xlu0 %v2183
      %v2185 = vpop.xlane.xlu0 %2184
      %v2186 = vsel %vm2152, %v2147, 0.0
      %2187 = vadd.xlane.f32.xlu0 %v2186
      %v2188 = vpop.xlane.xlu0 %2187
      %v2189 = vsel %vm2152, %v2148, 0.0
      %2190 = vadd.xlane.f32.xlu0 %v2189
      %v2191 = vpop.xlane.xlu0 %2190
      %v2192 = vsel %vm2152, %v2149, 0.0
      %2193 = vadd.xlane.f32.xlu0 %v2192
      %v2194 = vpop.xlane.xlu0 %2193
      %v2195 = vsel %vm2152, %v2150, 0.0
      %2196 = vadd.xlane.f32.xlu0 %v2195
      %v2197 = vpop.xlane.xlu0 %2196
      %v2198 = vsel %vm2152, %v2151, 0.0
      %2199 = vadd.xlane.f32.xlu0 %v2198
      %v2200 = vpop.xlane.xlu0 %2199
      %v2217 = vlaneseq
      %v2218 = vand.u32 %v2217, 127
      %v2219 = vlaneseq
      %v2220 = vshrl.u32 %v2219, 7
      %v2221 = vsub.s32 %v2218, %v2220
      %v2222 = vrot.slane %v2155, %v2221
      %v2223 = vadd.s32 %v2218, 4294967288
      %v2224 = vlaneseq
      %v2225 = vshrl.u32 %v2224, 7
      %v2226 = vsub.s32 %v2223, %v2225
      %v2227 = vrot.slane %v2158, %v2226
      %vm2228 = vcmask 130112
      %v2229 = vsel %vm2228, %v2227, %v2222
      %v2230 = vadd.s32 %v2218, 4294967280
      %v2231 = vlaneseq
      %v2232 = vshrl.u32 %v2231, 7
      %v2233 = vsub.s32 %v2230, %v2232
      %v2234 = vrot.slane %v2161, %v2233
      %vm2235 = vcmask 195712
      %v2236 = vsel %vm2235, %v2234, %v2229
      %v2237 = vadd.s32 %v2218, 4294967272
      %v2238 = vlaneseq
      %v2239 = vshrl.u32 %v2238, 7
      %v2240 = vsub.s32 %v2237, %v2239
      %v2241 = vrot.slane %v2164, %v2240
      %vm2242 = vcmask 261312
      %v2243 = vsel %vm2242, %v2241, %v2236
      %v2244 = vadd.s32 %v2218, 4294967264
      %v2245 = vlaneseq
      %v2246 = vshrl.u32 %v2245, 7
      %v2247 = vsub.s32 %v2244, %v2246
      %v2248 = vrot.slane %v2167, %v2247
      %vm2249 = vcmask 326912
      %v2250 = vsel %vm2249, %v2248, %v2243
      %v2251 = vadd.s32 %v2218, 4294967256
      %v2252 = vlaneseq
      %v2253 = vshrl.u32 %v2252, 7
      %v2254 = vsub.s32 %v2251, %v2253
      %v2255 = vrot.slane %v2170, %v2254
      %vm2256 = vcmask 392512
      %v2257 = vsel %vm2256, %v2255, %v2250
      %v2258 = vadd.s32 %v2218, 4294967248
      %v2259 = vlaneseq
      %v2260 = vshrl.u32 %v2259, 7
      %v2261 = vsub.s32 %v2258, %v2260
      %v2262 = vrot.slane %v2173, %v2261
      %vm2263 = vcmask 458112
      %v2264 = vsel %vm2263, %v2262, %v2257
      %v2265 = vadd.s32 %v2218, 4294967240
      %v2266 = vlaneseq
      %v2267 = vshrl.u32 %v2266, 7
      %v2268 = vsub.s32 %v2265, %v2267
      %v2269 = vrot.slane %v2176, %v2268
      %vm2270 = vcmask 523712
      %v2271 = vsel %vm2270, %v2269, %v2264
      %v2272 = vadd.s32 %v2218, 4294967232
      %v2273 = vlaneseq
      %v2274 = vshrl.u32 %v2273, 7
      %v2275 = vsub.s32 %v2272, %v2274
      %v2276 = vrot.slane %v2179, %v2275
      %vm2277 = vcmask 589312
      %v2278 = vsel %vm2277, %v2276, %v2271
      %v2279 = vadd.s32 %v2218, 4294967224
      %v2280 = vlaneseq
      %v2281 = vshrl.u32 %v2280, 7
      %v2282 = vsub.s32 %v2279, %v2281
      %v2283 = vrot.slane %v2182, %v2282
      %vm2284 = vcmask 654912
      %v2285 = vsel %vm2284, %v2283, %v2278
      %v2286 = vadd.s32 %v2218, 4294967216
      %v2287 = vlaneseq
      %v2288 = vshrl.u32 %v2287, 7
      %v2289 = vsub.s32 %v2286, %v2288
      %v2290 = vrot.slane %v2185, %v2289
      %vm2291 = vcmask 720512
      %v2292 = vsel %vm2291, %v2290, %v2285
      %v2293 = vadd.s32 %v2218, 4294967208
      %v2294 = vlaneseq
      %v2295 = vshrl.u32 %v2294, 7
      %v2296 = vsub.s32 %v2293, %v2295
      %v2297 = vrot.slane %v2188, %v2296
      %vm2298 = vcmask 786112
      %v2299 = vsel %vm2298, %v2297, %v2292
      %v2300 = vadd.s32 %v2218, 4294967200
      %v2301 = vlaneseq
      %v2302 = vshrl.u32 %v2301, 7
      %v2303 = vsub.s32 %v2300, %v2302
      %v2304 = vrot.slane %v2191, %v2303
      %vm2305 = vcmask 851712
      %v2306 = vsel %vm2305, %v2304, %v2299
      %v2307 = vadd.s32 %v2218, 4294967192
      %v2308 = vlaneseq
      %v2309 = vshrl.u32 %v2308, 7
      %v2310 = vsub.s32 %v2307, %v2309
      %v2311 = vrot.slane %v2194, %v2310
      %vm2312 = vcmask 917312
      %v2313 = vsel %vm2312, %v2311, %v2306
      %v2314 = vadd.s32 %v2218, 4294967184
      %v2315 = vlaneseq
      %v2316 = vshrl.u32 %v2315, 7
      %v2317 = vsub.s32 %v2314, %v2316
      %v2318 = vrot.slane %v2197, %v2317
      %vm2319 = vcmask 982912
      %v2320 = vsel %vm2319, %v2318, %v2313
      %v2321 = vadd.s32 %v2218, 4294967176
      %v2322 = vlaneseq
      %v2323 = vshrl.u32 %v2322, 7
      %v2324 = vsub.s32 %v2321, %v2323
      %v2325 = vrot.slane %v2200, %v2324
      %vm2326 = vcmask 1048512
      %v2327 = vsel %vm2326, %v2325, %v2320
      %2329 = vst [vmem:[%s195] sm:$0x1] %v2327
      %p2330 = scmp.lt.s32.totalorder %s15, 2
      %s2331 = scalar_select %p2330, %s15, 2
      %s2332 = scalar_lea.vmem %s4, %s2331
      // Predicated region
      $region37: #{gnn_h_forward.1} parent=35 // pred_check
        %p2333 = pneg %p122
      $region38: #{gnn_h_forward.1} parent=35 // pred_check_branch
        %2335 = sbr.rel (%p2333) target = $region40
      $region39: #{gnn_h_forward.1} parent=35 // pred_region
        _
      $region40: #{gnn_h_forward.1} parent=35 // pred_fallthru
        _
    $region36: #{gnn_h_forward.1} parent=5 // pred_fallthru
      _
    %p2336 = scmp.le.s32.totalorder 2, %s10
    // Predicated region
    $region41: #{gnn_h_forward.1} parent=5 // pred_check
      %p2337 = pneg %p2336
    $region42: #{gnn_h_forward.1} parent=5 // pred_check_branch
      %2339 = sbr.rel (%p2337) target = $region44
    $region43: #{gnn_h_forward.1} parent=5 // pred_region
      %s2340 = ssub.s32 %s10, 2
      // Predicated region
      $region45: #{gnn_h_forward.1} parent=43 // pred_check
        %p2341 = pneg %p128
      $region46: #{gnn_h_forward.1} parent=43 // pred_check_branch
        %2343 = sbr.rel (%p2341) target = $region48
      $region47: #{gnn_h_forward.1} parent=43 // pred_region
        %p2344 = scmp.lt.s32.totalorder %s16, 2
        %s2345 = scalar_select %p2344, %s16, 2
        %s2346 = scalar_lea.vmem %s4, %s2345
      $region48: #{gnn_h_forward.1} parent=43 // pred_fallthru
        _
    $region44: #{gnn_h_forward.1} parent=5 // pred_fallthru
      _
  $region6: #{gnn_h_forward.1} parent=0 // loop_footer
    %s14 = sadd.s32 1, %s10
  $region7: #{gnn_h_forward.1} parent=0 // loop_footer_branch
    %9 = sbr.rel target = $region3
  $region8: #{gnn_h_forward.1} parent=0 // loop_exit
    _

</llo_original>
